<compile_context>
chip_gen: v6e
topology: v6e:2x2x1
jax: 0.10.0
libtpu: 0.0.40
codegen_flags: <defaults>
</compile_context>

<pallas_src>
import numpy as np
import jax
import jax.numpy as jnp
from jax.experimental import pallas as pl
from jax.experimental.pallas import tpu as pltpu

# Small, forward-consistent shapes.
B = 2     # batch
T = 8     # sequence length
I = 4     # input_size
H = 32    # hidden_size  (4H = 128 -> exactly one vreg lane width)
NUM_SELECTED = 3  # unused by forward(); kept for parity with the module


def pointer_net_kernel(x_ref, wih_ref, whh_ref, b_ref, wattn_ref, out_ref):
    """Whole forward in one kernel invocation (all operands resident in VMEM).

    x_ref     : (B, T, I)  f32  batch-first input (as PyTorch batch_first)
    wih_ref   : (I, 4H)    f32  W_ih^T, gate cols [i,f,o,g], i/f/o cols * 0.5
    whh_ref   : (H, 4H)    f32  W_hh^T, gate cols [i,f,o,g], i/f/o cols * 0.5
    b_ref     : (1, 4H)    f32  bias_ih + bias_hh, same permutation/scaling
    wattn_ref : (1, H)     f32  attn Linear weight row (bias dropped)
    out_ref   : (B, T)     f32  softmax over T (last/lane axis)
    """
    x3 = x_ref[...]                  # (B, T, I)
    wih = wih_ref[...]               # (I, 4H)
    whh = whh_ref[...]               # (H, 4H)
    b = b_ref[...]                   # (1, 4H)
    wattn = wattn_ref[...]           # (1, H)

    # Compile-time one-hot masks for scattering the per-step logit to lane t.
    eye = jnp.eye(T, dtype=jnp.float32)

    h = jnp.zeros((B, H), jnp.float32)
    c = jnp.zeros((B, H), jnp.float32)
    logits = jnp.zeros((B, T), jnp.float32)

    # Fully unrolled recurrence (T is small and static).
    for t in range(T):
        xt = x3[:, t, :]                                             # (B, I)
        gates = (jnp.dot(xt, wih, preferred_element_type=jnp.float32)
                 + b
                 + jnp.dot(h, whh, preferred_element_type=jnp.float32))  # (B, 4H)

        # Single EUP push for ALL gates: i/f/o columns were pre-scaled by 0.5
        # host-side, so sigmoid(z) = 0.5*(tanh(z/2)+1) = 0.5*(tanh(gates)+1).
        th = jnp.tanh(gates)                                         # (B, 4H)
        sig = 0.5 * (th[:, 0:3 * H] + 1.0)
        i_g = sig[:, 0:H]
        f_g = sig[:, H:2 * H]
        o_g = sig[:, 2 * H:3 * H]
        g_g = th[:, 3 * H:4 * H]

        c = f_g * c + i_g * g_g
        h = o_g * jnp.tanh(c)

        # Per-step attention logit: VPU multiply + lane reduce (XLU),
        # accumulated at lane t.  Off the h->h critical chain.
        logit_t = jnp.sum(h * wattn, axis=-1, keepdims=True)         # (B, 1)
        logits = logits + logit_t * eye[t:t + 1, :]                  # (B, T)

    # Softmax over the sequence (last / lane) axis. Exact division.
    m = jnp.max(logits, axis=-1, keepdims=True)
    e = jnp.exp(logits - m)
    s = jnp.sum(e, axis=-1, keepdims=True)
    out_ref[...] = e / s


def prepare_pointer_params(wih_t, whh_t, b_ih, b_hh, wattn_row):
    """One-time parameter preprocessing (NOT in the per-call hot path).

    Permutes LSTM gate columns from PyTorch order [i,f,g,o] -> [i,f,o,g] and
    pre-scales the i/f/o columns by 0.5 so the kernel can compute all gate
    activations with a single tanh.
    """
    perm = np.concatenate([np.arange(0, 2 * H),
                           np.arange(3 * H, 4 * H),
                           np.arange(2 * H, 3 * H)])
    scale = jnp.concatenate([jnp.full((3 * H,), 0.5, jnp.float32),
                             jnp.ones((H,), jnp.float32)])[None, :]   # (1, 4H)
    wih_p = wih_t[:, perm] * scale
    whh_p = whh_t[:, perm] * scale
    b_p = (b_ih + b_hh)[:, perm] * scale
    return wih_p, whh_p, b_p, wattn_row


def pointer_network_forward(x, wih_p, whh_p, b_p, wattn_row):
    """x: (B, T, I).  Parameters already prepared by prepare_pointer_params."""
    vmem = pl.BlockSpec(memory_space=pltpu.MemorySpace.VMEM)
    out_bt = pl.pallas_call(
        pointer_net_kernel,
        out_shape=jax.ShapeDtypeStruct((B, T), jnp.float32),
        in_specs=[vmem, vmem, vmem, vmem, vmem],
        out_specs=vmem,
    )(x, wih_p, whh_p, b_p, wattn_row)
    return out_bt[..., None]   # (B, T, 1) to match the PyTorch module


def reference_forward(x, wih_t, whh_t, b_ih, b_hh, wattn_row, battn):
    """Pure-JAX reference implementing the exact PyTorch semantics."""
    b = b_ih + b_hh
    wattn = jnp.transpose(wattn_row)                  # (H, 1)
    h = jnp.zeros((B, H), jnp.float32)
    c = jnp.zeros((B, H), jnp.float32)
    logits = []
    for t in range(T):
        gates = x[:, t, :] @ wih_t + h @ whh_t + b
        i_g = jax.nn.sigmoid(gates[:, 0:H])
        f_g = jax.nn.sigmoid(gates[:, H:2 * H])
        g_g = jnp.tanh(gates[:, 2 * H:3 * H])
        o_g = jax.nn.sigmoid(gates[:, 3 * H:4 * H])
        c = f_g * c + i_g * g_g
        h = o_g * jnp.tanh(c)
        logits.append(h @ wattn + battn)
    logits = jnp.concatenate(logits, axis=1)          # (B, T)
    return jax.nn.softmax(logits, axis=1)[..., None]  # (B, T, 1)


if __name__ == "__main__":
    key = jax.random.PRNGKey(0)
    k_x, k_wih, k_whh, k_bih, k_bhh, k_wa, k_ba = jax.random.split(key, 7)

    # Deterministic PyTorch-style init: uniform(-1/sqrt(H), 1/sqrt(H)).
    bound = 1.0 / jnp.sqrt(jnp.float32(H))
    wih_t = jax.random.uniform(k_wih, (I, 4 * H), jnp.float32, -bound, bound)
    whh_t = jax.random.uniform(k_whh, (H, 4 * H), jnp.float32, -bound, bound)
    b_ih = jax.random.uniform(k_bih, (1, 4 * H), jnp.float32, -bound, bound)
    b_hh = jax.random.uniform(k_bhh, (1, 4 * H), jnp.float32, -bound, bound)
    wattn_row = jax.random.uniform(k_wa, (1, H), jnp.float32, -bound, bound)
    battn = jax.random.uniform(k_ba, (1, 1), jnp.float32, -bound, bound)

    x = jax.random.normal(k_x, (B, T, I), jnp.float32)

    # One-time parameter prep (gate permutation + 0.5 scaling of i/f/o cols).
    # The attention bias is dropped: softmax over the sequence is shift-invariant.
    wih_p, whh_p, b_p, wattn_p = prepare_pointer_params(
        wih_t, whh_t, b_ih, b_hh, wattn_row)

    out = pointer_network_forward(x, wih_p, whh_p, b_p, wattn_p)
    out = jax.block_until_ready(out)

    ref = reference_forward(x, wih_t, whh_t, b_ih, b_hh, wattn_row, battn)
    assert out.shape == (B, T, 1)
    assert jnp.allclose(out, ref, atol=1e-4, rtol=1e-4)
    # softmax over the sequence axis must sum to ~1 per batch element
    assert jnp.allclose(jnp.sum(out, axis=1), 1.0, atol=1e-4)

    print("KERNEL_OK")
</pallas_src>

<mosaic_0001>
module attributes {stable_mosaic.version = 11 : i64} {
  func.func @pointer_net_kernel(%arg0: memref<2x8x4xf32, #tpu.memory_space<vmem>>, %arg1: memref<4x128xf32, #tpu.memory_space<vmem>>, %arg2: memref<32x128xf32, #tpu.memory_space<vmem>>, %arg3: memref<1x128xf32, #tpu.memory_space<vmem>>, %arg4: memref<1x32xf32, #tpu.memory_space<vmem>>, %arg5: memref<2x8xf32, #tpu.memory_space<vmem>>) attributes {dimension_semantics = [], scalar_prefetch = 0 : i64, scratch_operands = 0 : i64, tpu.core_type = #tpu.core_type<tc>} {
    %c0 = arith.constant 0 : index
    %c0_0 = arith.constant 0 : index
    %c0_1 = arith.constant 0 : index
    %0 = vector.load %arg0[%c0, %c0_0, %c0_1] : memref<2x8x4xf32, #tpu.memory_space<vmem>>, vector<2x8x4xf32>
    %c0_2 = arith.constant 0 : index
    %c0_3 = arith.constant 0 : index
    %1 = vector.load %arg1[%c0_2, %c0_3] : memref<4x128xf32, #tpu.memory_space<vmem>>, vector<4x128xf32>
    %c0_4 = arith.constant 0 : index
    %c0_5 = arith.constant 0 : index
    %2 = vector.load %arg2[%c0_4, %c0_5] : memref<32x128xf32, #tpu.memory_space<vmem>>, vector<32x128xf32>
    %c0_6 = arith.constant 0 : index
    %c0_7 = arith.constant 0 : index
    %3 = vector.load %arg3[%c0_6, %c0_7] : memref<1x128xf32, #tpu.memory_space<vmem>>, vector<1x128xf32>
    %c0_8 = arith.constant 0 : index
    %c0_9 = arith.constant 0 : index
    %4 = vector.load %arg4[%c0_8, %c0_9] : memref<1x32xf32, #tpu.memory_space<vmem>>, vector<1x32xf32>
    %5 = tpu.iota {dimensions = array<i32: 0>} : vector<8x8xi32>
    %6 = tpu.iota {dimensions = array<i32: 1>} : vector<8x8xi32>
    %c0_i32 = arith.constant 0 : i32
    %7 = vector.broadcast %c0_i32 : i32 to vector<8x8xi32>
    %8 = arith.addi %5, %7 : vector<8x8xi32>
    %9 = arith.cmpi eq, %8, %6 : vector<8x8xi32>
    %10 = arith.extui %9 : vector<8x8xi1> to vector<8x8xi32>
    %11 = arith.sitofp %10 : vector<8x8xi32> to vector<8x8xf32>
    %cst = arith.constant 0.000000e+00 : f32
    %12 = vector.broadcast %cst : f32 to vector<2x32xf32>
    %cst_10 = arith.constant 0.000000e+00 : f32
    %13 = vector.broadcast %cst_10 : f32 to vector<2x32xf32>
    %cst_11 = arith.constant 0.000000e+00 : f32
    %14 = vector.broadcast %cst_11 : f32 to vector<2x8xf32>
    %15 = vector.extract_strided_slice %0 {offsets = [0, 0, 0], sizes = [2, 1, 4], strides = [1, 1, 1]} : vector<2x8x4xf32> to vector<2x1x4xf32>
    %16 = vector.shape_cast %15 : vector<2x1x4xf32> to vector<2x4xf32>
    %cst_12 = arith.constant dense<0.000000e+00> : vector<2x128xf32>
    %17 = tpu.matmul %16, %1, %cst_12 {dimension_numbers = #tpu.dot_dimension_numbers<[1], [0], [0], [1], [0, 0, 1, 1], [], []>} : vector<2x4xf32>, vector<4x128xf32>, vector<2x128xf32> -> vector<2x128xf32>
    %18 = vector.broadcast %3 : vector<1x128xf32> to vector<2x128xf32>
    %19 = arith.addf %17, %18 : vector<2x128xf32>
    %cst_13 = arith.constant dense<0.000000e+00> : vector<2x128xf32>
    %20 = tpu.matmul %12, %2, %cst_13 {dimension_numbers = #tpu.dot_dimension_numbers<[1], [0], [0], [1], [0, 0, 1, 1], [], []>} : vector<2x32xf32>, vector<32x128xf32>, vector<2x128xf32> -> vector<2x128xf32>
    %21 = arith.addf %19, %20 : vector<2x128xf32>
    %22 = math.tanh %21 : vector<2x128xf32>
    %23 = vector.extract_strided_slice %22 {offsets = [0, 0], sizes = [2, 96], strides = [1, 1]} : vector<2x128xf32> to vector<2x96xf32>
    %cst_14 = arith.constant 1.000000e+00 : f32
    %24 = vector.broadcast %cst_14 : f32 to vector<2x96xf32>
    %25 = arith.addf %23, %24 : vector<2x96xf32>
    %cst_15 = arith.constant 5.000000e-01 : f32
    %26 = vector.broadcast %cst_15 : f32 to vector<2x96xf32>
    %27 = arith.mulf %26, %25 : vector<2x96xf32>
    %28 = vector.extract_strided_slice %27 {offsets = [0, 0], sizes = [2, 32], strides = [1, 1]} : vector<2x96xf32> to vector<2x32xf32>
    %29 = vector.extract_strided_slice %27 {offsets = [0, 32], sizes = [2, 32], strides = [1, 1]} : vector<2x96xf32> to vector<2x32xf32>
    %30 = vector.extract_strided_slice %27 {offsets = [0, 64], sizes = [2, 32], strides = [1, 1]} : vector<2x96xf32> to vector<2x32xf32>
    %31 = vector.extract_strided_slice %22 {offsets = [0, 96], sizes = [2, 32], strides = [1, 1]} : vector<2x128xf32> to vector<2x32xf32>
    %32 = arith.mulf %29, %13 : vector<2x32xf32>
    %33 = arith.mulf %28, %31 : vector<2x32xf32>
    %34 = arith.addf %32, %33 : vector<2x32xf32>
    %35 = math.tanh %34 : vector<2x32xf32>
    %36 = arith.mulf %30, %35 : vector<2x32xf32>
    %37 = vector.broadcast %4 : vector<1x32xf32> to vector<2x32xf32>
    %38 = arith.mulf %36, %37 : vector<2x32xf32>
    %cst_16 = arith.constant dense<0.000000e+00> : vector<2xf32>
    %39 = vector.multi_reduction <add>, %38, %cst_16 [1] : vector<2x32xf32> to vector<2xf32>
    %40 = vector.shape_cast %39 : vector<2xf32> to vector<2x1xf32>
    %41 = vector.extract_strided_slice %11 {offsets = [0, 0], sizes = [1, 8], strides = [1, 1]} : vector<8x8xf32> to vector<1x8xf32>
    %42 = vector.broadcast %40 : vector<2x1xf32> to vector<2x8xf32>
    %43 = vector.broadcast %41 : vector<1x8xf32> to vector<2x8xf32>
    %44 = arith.mulf %42, %43 : vector<2x8xf32>
    %45 = arith.addf %14, %44 : vector<2x8xf32>
    %46 = vector.extract_strided_slice %0 {offsets = [0, 1, 0], sizes = [2, 1, 4], strides = [1, 1, 1]} : vector<2x8x4xf32> to vector<2x1x4xf32>
    %47 = vector.shape_cast %46 : vector<2x1x4xf32> to vector<2x4xf32>
    %cst_17 = arith.constant dense<0.000000e+00> : vector<2x128xf32>
    %48 = tpu.matmul %47, %1, %cst_17 {dimension_numbers = #tpu.dot_dimension_numbers<[1], [0], [0], [1], [0, 0, 1, 1], [], []>} : vector<2x4xf32>, vector<4x128xf32>, vector<2x128xf32> -> vector<2x128xf32>
    %49 = vector.broadcast %3 : vector<1x128xf32> to vector<2x128xf32>
    %50 = arith.addf %48, %49 : vector<2x128xf32>
    %cst_18 = arith.constant dense<0.000000e+00> : vector<2x128xf32>
    %51 = tpu.matmul %36, %2, %cst_18 {dimension_numbers = #tpu.dot_dimension_numbers<[1], [0], [0], [1], [0, 0, 1, 1], [], []>} : vector<2x32xf32>, vector<32x128xf32>, vector<2x128xf32> -> vector<2x128xf32>
    %52 = arith.addf %50, %51 : vector<2x128xf32>
    %53 = math.tanh %52 : vector<2x128xf32>
    %54 = vector.extract_strided_slice %53 {offsets = [0, 0], sizes = [2, 96], strides = [1, 1]} : vector<2x128xf32> to vector<2x96xf32>
    %cst_19 = arith.constant 1.000000e+00 : f32
    %55 = vector.broadcast %cst_19 : f32 to vector<2x96xf32>
    %56 = arith.addf %54, %55 : vector<2x96xf32>
    %cst_20 = arith.constant 5.000000e-01 : f32
    %57 = vector.broadcast %cst_20 : f32 to vector<2x96xf32>
    %58 = arith.mulf %57, %56 : vector<2x96xf32>
    %59 = vector.extract_strided_slice %58 {offsets = [0, 0], sizes = [2, 32], strides = [1, 1]} : vector<2x96xf32> to vector<2x32xf32>
    %60 = vector.extract_strided_slice %58 {offsets = [0, 32], sizes = [2, 32], strides = [1, 1]} : vector<2x96xf32> to vector<2x32xf32>
    %61 = vector.extract_strided_slice %58 {offsets = [0, 64], sizes = [2, 32], strides = [1, 1]} : vector<2x96xf32> to vector<2x32xf32>
    %62 = vector.extract_strided_slice %53 {offsets = [0, 96], sizes = [2, 32], strides = [1, 1]} : vector<2x128xf32> to vector<2x32xf32>
    %63 = arith.mulf %60, %34 : vector<2x32xf32>
    %64 = arith.mulf %59, %62 : vector<2x32xf32>
    %65 = arith.addf %63, %64 : vector<2x32xf32>
    %66 = math.tanh %65 : vector<2x32xf32>
    %67 = arith.mulf %61, %66 : vector<2x32xf32>
    %68 = vector.broadcast %4 : vector<1x32xf32> to vector<2x32xf32>
    %69 = arith.mulf %67, %68 : vector<2x32xf32>
    %cst_21 = arith.constant dense<0.000000e+00> : vector<2xf32>
    %70 = vector.multi_reduction <add>, %69, %cst_21 [1] : vector<2x32xf32> to vector<2xf32>
    %71 = vector.shape_cast %70 : vector<2xf32> to vector<2x1xf32>
    %72 = vector.extract_strided_slice %11 {offsets = [1, 0], sizes = [1, 8], strides = [1, 1]} : vector<8x8xf32> to vector<1x8xf32>
    %73 = vector.broadcast %71 : vector<2x1xf32> to vector<2x8xf32>
    %74 = vector.broadcast %72 : vector<1x8xf32> to vector<2x8xf32>
    %75 = arith.mulf %73, %74 : vector<2x8xf32>
    %76 = arith.addf %45, %75 : vector<2x8xf32>
    %77 = vector.extract_strided_slice %0 {offsets = [0, 2, 0], sizes = [2, 1, 4], strides = [1, 1, 1]} : vector<2x8x4xf32> to vector<2x1x4xf32>
    %78 = vector.shape_cast %77 : vector<2x1x4xf32> to vector<2x4xf32>
    %cst_22 = arith.constant dense<0.000000e+00> : vector<2x128xf32>
    %79 = tpu.matmul %78, %1, %cst_22 {dimension_numbers = #tpu.dot_dimension_numbers<[1], [0], [0], [1], [0, 0, 1, 1], [], []>} : vector<2x4xf32>, vector<4x128xf32>, vector<2x128xf32> -> vector<2x128xf32>
    %80 = vector.broadcast %3 : vector<1x128xf32> to vector<2x128xf32>
    %81 = arith.addf %79, %80 : vector<2x128xf32>
    %cst_23 = arith.constant dense<0.000000e+00> : vector<2x128xf32>
    %82 = tpu.matmul %67, %2, %cst_23 {dimension_numbers = #tpu.dot_dimension_numbers<[1], [0], [0], [1], [0, 0, 1, 1], [], []>} : vector<2x32xf32>, vector<32x128xf32>, vector<2x128xf32> -> vector<2x128xf32>
    %83 = arith.addf %81, %82 : vector<2x128xf32>
    %84 = math.tanh %83 : vector<2x128xf32>
    %85 = vector.extract_strided_slice %84 {offsets = [0, 0], sizes = [2, 96], strides = [1, 1]} : vector<2x128xf32> to vector<2x96xf32>
    %cst_24 = arith.constant 1.000000e+00 : f32
    %86 = vector.broadcast %cst_24 : f32 to vector<2x96xf32>
    %87 = arith.addf %85, %86 : vector<2x96xf32>
    %cst_25 = arith.constant 5.000000e-01 : f32
    %88 = vector.broadcast %cst_25 : f32 to vector<2x96xf32>
    %89 = arith.mulf %88, %87 : vector<2x96xf32>
    %90 = vector.extract_strided_slice %89 {offsets = [0, 0], sizes = [2, 32], strides = [1, 1]} : vector<2x96xf32> to vector<2x32xf32>
    %91 = vector.extract_strided_slice %89 {offsets = [0, 32], sizes = [2, 32], strides = [1, 1]} : vector<2x96xf32> to vector<2x32xf32>
    %92 = vector.extract_strided_slice %89 {offsets = [0, 64], sizes = [2, 32], strides = [1, 1]} : vector<2x96xf32> to vector<2x32xf32>
    %93 = vector.extract_strided_slice %84 {offsets = [0, 96], sizes = [2, 32], strides = [1, 1]} : vector<2x128xf32> to vector<2x32xf32>
    %94 = arith.mulf %91, %65 : vector<2x32xf32>
    %95 = arith.mulf %90, %93 : vector<2x32xf32>
    %96 = arith.addf %94, %95 : vector<2x32xf32>
    %97 = math.tanh %96 : vector<2x32xf32>
    %98 = arith.mulf %92, %97 : vector<2x32xf32>
    %99 = vector.broadcast %4 : vector<1x32xf32> to vector<2x32xf32>
    %100 = arith.mulf %98, %99 : vector<2x32xf32>
    %cst_26 = arith.constant dense<0.000000e+00> : vector<2xf32>
    %101 = vector.multi_reduction <add>, %100, %cst_26 [1] : vector<2x32xf32> to vector<2xf32>
    %102 = vector.shape_cast %101 : vector<2xf32> to vector<2x1xf32>
    %103 = vector.extract_strided_slice %11 {offsets = [2, 0], sizes = [1, 8], strides = [1, 1]} : vector<8x8xf32> to vector<1x8xf32>
    %104 = vector.broadcast %102 : vector<2x1xf32> to vector<2x8xf32>
    %105 = vector.broadcast %103 : vector<1x8xf32> to vector<2x8xf32>
    %106 = arith.mulf %104, %105 : vector<2x8xf32>
    %107 = arith.addf %76, %106 : vector<2x8xf32>
    %108 = vector.extract_strided_slice %0 {offsets = [0, 3, 0], sizes = [2, 1, 4], strides = [1, 1, 1]} : vector<2x8x4xf32> to vector<2x1x4xf32>
    %109 = vector.shape_cast %108 : vector<2x1x4xf32> to vector<2x4xf32>
    %cst_27 = arith.constant dense<0.000000e+00> : vector<2x128xf32>
    %110 = tpu.matmul %109, %1, %cst_27 {dimension_numbers = #tpu.dot_dimension_numbers<[1], [0], [0], [1], [0, 0, 1, 1], [], []>} : vector<2x4xf32>, vector<4x128xf32>, vector<2x128xf32> -> vector<2x128xf32>
    %111 = vector.broadcast %3 : vector<1x128xf32> to vector<2x128xf32>
    %112 = arith.addf %110, %111 : vector<2x128xf32>
    %cst_28 = arith.constant dense<0.000000e+00> : vector<2x128xf32>
    %113 = tpu.matmul %98, %2, %cst_28 {dimension_numbers = #tpu.dot_dimension_numbers<[1], [0], [0], [1], [0, 0, 1, 1], [], []>} : vector<2x32xf32>, vector<32x128xf32>, vector<2x128xf32> -> vector<2x128xf32>
    %114 = arith.addf %112, %113 : vector<2x128xf32>
    %115 = math.tanh %114 : vector<2x128xf32>
    %116 = vector.extract_strided_slice %115 {offsets = [0, 0], sizes = [2, 96], strides = [1, 1]} : vector<2x128xf32> to vector<2x96xf32>
    %cst_29 = arith.constant 1.000000e+00 : f32
    %117 = vector.broadcast %cst_29 : f32 to vector<2x96xf32>
    %118 = arith.addf %116, %117 : vector<2x96xf32>
    %cst_30 = arith.constant 5.000000e-01 : f32
    %119 = vector.broadcast %cst_30 : f32 to vector<2x96xf32>
    %120 = arith.mulf %119, %118 : vector<2x96xf32>
    %121 = vector.extract_strided_slice %120 {offsets = [0, 0], sizes = [2, 32], strides = [1, 1]} : vector<2x96xf32> to vector<2x32xf32>
    %122 = vector.extract_strided_slice %120 {offsets = [0, 32], sizes = [2, 32], strides = [1, 1]} : vector<2x96xf32> to vector<2x32xf32>
    %123 = vector.extract_strided_slice %120 {offsets = [0, 64], sizes = [2, 32], strides = [1, 1]} : vector<2x96xf32> to vector<2x32xf32>
    %124 = vector.extract_strided_slice %115 {offsets = [0, 96], sizes = [2, 32], strides = [1, 1]} : vector<2x128xf32> to vector<2x32xf32>
    %125 = arith.mulf %122, %96 : vector<2x32xf32>
    %126 = arith.mulf %121, %124 : vector<2x32xf32>
    %127 = arith.addf %125, %126 : vector<2x32xf32>
    %128 = math.tanh %127 : vector<2x32xf32>
    %129 = arith.mulf %123, %128 : vector<2x32xf32>
    %130 = vector.broadcast %4 : vector<1x32xf32> to vector<2x32xf32>
    %131 = arith.mulf %129, %130 : vector<2x32xf32>
    %cst_31 = arith.constant dense<0.000000e+00> : vector<2xf32>
    %132 = vector.multi_reduction <add>, %131, %cst_31 [1] : vector<2x32xf32> to vector<2xf32>
    %133 = vector.shape_cast %132 : vector<2xf32> to vector<2x1xf32>
    %134 = vector.extract_strided_slice %11 {offsets = [3, 0], sizes = [1, 8], strides = [1, 1]} : vector<8x8xf32> to vector<1x8xf32>
    %135 = vector.broadcast %133 : vector<2x1xf32> to vector<2x8xf32>
    %136 = vector.broadcast %134 : vector<1x8xf32> to vector<2x8xf32>
    %137 = arith.mulf %135, %136 : vector<2x8xf32>
    %138 = arith.addf %107, %137 : vector<2x8xf32>
    %139 = vector.extract_strided_slice %0 {offsets = [0, 4, 0], sizes = [2, 1, 4], strides = [1, 1, 1]} : vector<2x8x4xf32> to vector<2x1x4xf32>
    %140 = vector.shape_cast %139 : vector<2x1x4xf32> to vector<2x4xf32>
    %cst_32 = arith.constant dense<0.000000e+00> : vector<2x128xf32>
    %141 = tpu.matmul %140, %1, %cst_32 {dimension_numbers = #tpu.dot_dimension_numbers<[1], [0], [0], [1], [0, 0, 1, 1], [], []>} : vector<2x4xf32>, vector<4x128xf32>, vector<2x128xf32> -> vector<2x128xf32>
    %142 = vector.broadcast %3 : vector<1x128xf32> to vector<2x128xf32>
    %143 = arith.addf %141, %142 : vector<2x128xf32>
    %cst_33 = arith.constant dense<0.000000e+00> : vector<2x128xf32>
    %144 = tpu.matmul %129, %2, %cst_33 {dimension_numbers = #tpu.dot_dimension_numbers<[1], [0], [0], [1], [0, 0, 1, 1], [], []>} : vector<2x32xf32>, vector<32x128xf32>, vector<2x128xf32> -> vector<2x128xf32>
    %145 = arith.addf %143, %144 : vector<2x128xf32>
    %146 = math.tanh %145 : vector<2x128xf32>
    %147 = vector.extract_strided_slice %146 {offsets = [0, 0], sizes = [2, 96], strides = [1, 1]} : vector<2x128xf32> to vector<2x96xf32>
    %cst_34 = arith.constant 1.000000e+00 : f32
    %148 = vector.broadcast %cst_34 : f32 to vector<2x96xf32>
    %149 = arith.addf %147, %148 : vector<2x96xf32>
    %cst_35 = arith.constant 5.000000e-01 : f32
    %150 = vector.broadcast %cst_35 : f32 to vector<2x96xf32>
    %151 = arith.mulf %150, %149 : vector<2x96xf32>
    %152 = vector.extract_strided_slice %151 {offsets = [0, 0], sizes = [2, 32], strides = [1, 1]} : vector<2x96xf32> to vector<2x32xf32>
    %153 = vector.extract_strided_slice %151 {offsets = [0, 32], sizes = [2, 32], strides = [1, 1]} : vector<2x96xf32> to vector<2x32xf32>
    %154 = vector.extract_strided_slice %151 {offsets = [0, 64], sizes = [2, 32], strides = [1, 1]} : vector<2x96xf32> to vector<2x32xf32>
    %155 = vector.extract_strided_slice %146 {offsets = [0, 96], sizes = [2, 32], strides = [1, 1]} : vector<2x128xf32> to vector<2x32xf32>
    %156 = arith.mulf %153, %127 : vector<2x32xf32>
    %157 = arith.mulf %152, %155 : vector<2x32xf32>
    %158 = arith.addf %156, %157 : vector<2x32xf32>
    %159 = math.tanh %158 : vector<2x32xf32>
    %160 = arith.mulf %154, %159 : vector<2x32xf32>
    %161 = vector.broadcast %4 : vector<1x32xf32> to vector<2x32xf32>
    %162 = arith.mulf %160, %161 : vector<2x32xf32>
    %cst_36 = arith.constant dense<0.000000e+00> : vector<2xf32>
    %163 = vector.multi_reduction <add>, %162, %cst_36 [1] : vector<2x32xf32> to vector<2xf32>
    %164 = vector.shape_cast %163 : vector<2xf32> to vector<2x1xf32>
    %165 = vector.extract_strided_slice %11 {offsets = [4, 0], sizes = [1, 8], strides = [1, 1]} : vector<8x8xf32> to vector<1x8xf32>
    %166 = vector.broadcast %164 : vector<2x1xf32> to vector<2x8xf32>
    %167 = vector.broadcast %165 : vector<1x8xf32> to vector<2x8xf32>
    %168 = arith.mulf %166, %167 : vector<2x8xf32>
    %169 = arith.addf %138, %168 : vector<2x8xf32>
    %170 = vector.extract_strided_slice %0 {offsets = [0, 5, 0], sizes = [2, 1, 4], strides = [1, 1, 1]} : vector<2x8x4xf32> to vector<2x1x4xf32>
    %171 = vector.shape_cast %170 : vector<2x1x4xf32> to vector<2x4xf32>
    %cst_37 = arith.constant dense<0.000000e+00> : vector<2x128xf32>
    %172 = tpu.matmul %171, %1, %cst_37 {dimension_numbers = #tpu.dot_dimension_numbers<[1], [0], [0], [1], [0, 0, 1, 1], [], []>} : vector<2x4xf32>, vector<4x128xf32>, vector<2x128xf32> -> vector<2x128xf32>
    %173 = vector.broadcast %3 : vector<1x128xf32> to vector<2x128xf32>
    %174 = arith.addf %172, %173 : vector<2x128xf32>
    %cst_38 = arith.constant dense<0.000000e+00> : vector<2x128xf32>
    %175 = tpu.matmul %160, %2, %cst_38 {dimension_numbers = #tpu.dot_dimension_numbers<[1], [0], [0], [1], [0, 0, 1, 1], [], []>} : vector<2x32xf32>, vector<32x128xf32>, vector<2x128xf32> -> vector<2x128xf32>
    %176 = arith.addf %174, %175 : vector<2x128xf32>
    %177 = math.tanh %176 : vector<2x128xf32>
    %178 = vector.extract_strided_slice %177 {offsets = [0, 0], sizes = [2, 96], strides = [1, 1]} : vector<2x128xf32> to vector<2x96xf32>
    %cst_39 = arith.constant 1.000000e+00 : f32
    %179 = vector.broadcast %cst_39 : f32 to vector<2x96xf32>
    %180 = arith.addf %178, %179 : vector<2x96xf32>
    %cst_40 = arith.constant 5.000000e-01 : f32
    %181 = vector.broadcast %cst_40 : f32 to vector<2x96xf32>
    %182 = arith.mulf %181, %180 : vector<2x96xf32>
    %183 = vector.extract_strided_slice %182 {offsets = [0, 0], sizes = [2, 32], strides = [1, 1]} : vector<2x96xf32> to vector<2x32xf32>
    %184 = vector.extract_strided_slice %182 {offsets = [0, 32], sizes = [2, 32], strides = [1, 1]} : vector<2x96xf32> to vector<2x32xf32>
    %185 = vector.extract_strided_slice %182 {offsets = [0, 64], sizes = [2, 32], strides = [1, 1]} : vector<2x96xf32> to vector<2x32xf32>
    %186 = vector.extract_strided_slice %177 {offsets = [0, 96], sizes = [2, 32], strides = [1, 1]} : vector<2x128xf32> to vector<2x32xf32>
    %187 = arith.mulf %184, %158 : vector<2x32xf32>
    %188 = arith.mulf %183, %186 : vector<2x32xf32>
    %189 = arith.addf %187, %188 : vector<2x32xf32>
    %190 = math.tanh %189 : vector<2x32xf32>
    %191 = arith.mulf %185, %190 : vector<2x32xf32>
    %192 = vector.broadcast %4 : vector<1x32xf32> to vector<2x32xf32>
    %193 = arith.mulf %191, %192 : vector<2x32xf32>
    %cst_41 = arith.constant dense<0.000000e+00> : vector<2xf32>
    %194 = vector.multi_reduction <add>, %193, %cst_41 [1] : vector<2x32xf32> to vector<2xf32>
    %195 = vector.shape_cast %194 : vector<2xf32> to vector<2x1xf32>
    %196 = vector.extract_strided_slice %11 {offsets = [5, 0], sizes = [1, 8], strides = [1, 1]} : vector<8x8xf32> to vector<1x8xf32>
    %197 = vector.broadcast %195 : vector<2x1xf32> to vector<2x8xf32>
    %198 = vector.broadcast %196 : vector<1x8xf32> to vector<2x8xf32>
    %199 = arith.mulf %197, %198 : vector<2x8xf32>
    %200 = arith.addf %169, %199 : vector<2x8xf32>
    %201 = vector.extract_strided_slice %0 {offsets = [0, 6, 0], sizes = [2, 1, 4], strides = [1, 1, 1]} : vector<2x8x4xf32> to vector<2x1x4xf32>
    %202 = vector.shape_cast %201 : vector<2x1x4xf32> to vector<2x4xf32>
    %cst_42 = arith.constant dense<0.000000e+00> : vector<2x128xf32>
    %203 = tpu.matmul %202, %1, %cst_42 {dimension_numbers = #tpu.dot_dimension_numbers<[1], [0], [0], [1], [0, 0, 1, 1], [], []>} : vector<2x4xf32>, vector<4x128xf32>, vector<2x128xf32> -> vector<2x128xf32>
    %204 = vector.broadcast %3 : vector<1x128xf32> to vector<2x128xf32>
    %205 = arith.addf %203, %204 : vector<2x128xf32>
    %cst_43 = arith.constant dense<0.000000e+00> : vector<2x128xf32>
    %206 = tpu.matmul %191, %2, %cst_43 {dimension_numbers = #tpu.dot_dimension_numbers<[1], [0], [0], [1], [0, 0, 1, 1], [], []>} : vector<2x32xf32>, vector<32x128xf32>, vector<2x128xf32> -> vector<2x128xf32>
    %207 = arith.addf %205, %206 : vector<2x128xf32>
    %208 = math.tanh %207 : vector<2x128xf32>
    %209 = vector.extract_strided_slice %208 {offsets = [0, 0], sizes = [2, 96], strides = [1, 1]} : vector<2x128xf32> to vector<2x96xf32>
    %cst_44 = arith.constant 1.000000e+00 : f32
    %210 = vector.broadcast %cst_44 : f32 to vector<2x96xf32>
    %211 = arith.addf %209, %210 : vector<2x96xf32>
    %cst_45 = arith.constant 5.000000e-01 : f32
    %212 = vector.broadcast %cst_45 : f32 to vector<2x96xf32>
    %213 = arith.mulf %212, %211 : vector<2x96xf32>
    %214 = vector.extract_strided_slice %213 {offsets = [0, 0], sizes = [2, 32], strides = [1, 1]} : vector<2x96xf32> to vector<2x32xf32>
    %215 = vector.extract_strided_slice %213 {offsets = [0, 32], sizes = [2, 32], strides = [1, 1]} : vector<2x96xf32> to vector<2x32xf32>
    %216 = vector.extract_strided_slice %213 {offsets = [0, 64], sizes = [2, 32], strides = [1, 1]} : vector<2x96xf32> to vector<2x32xf32>
    %217 = vector.extract_strided_slice %208 {offsets = [0, 96], sizes = [2, 32], strides = [1, 1]} : vector<2x128xf32> to vector<2x32xf32>
    %218 = arith.mulf %215, %189 : vector<2x32xf32>
    %219 = arith.mulf %214, %217 : vector<2x32xf32>
    %220 = arith.addf %218, %219 : vector<2x32xf32>
    %221 = math.tanh %220 : vector<2x32xf32>
    %222 = arith.mulf %216, %221 : vector<2x32xf32>
    %223 = vector.broadcast %4 : vector<1x32xf32> to vector<2x32xf32>
    %224 = arith.mulf %222, %223 : vector<2x32xf32>
    %cst_46 = arith.constant dense<0.000000e+00> : vector<2xf32>
    %225 = vector.multi_reduction <add>, %224, %cst_46 [1] : vector<2x32xf32> to vector<2xf32>
    %226 = vector.shape_cast %225 : vector<2xf32> to vector<2x1xf32>
    %227 = vector.extract_strided_slice %11 {offsets = [6, 0], sizes = [1, 8], strides = [1, 1]} : vector<8x8xf32> to vector<1x8xf32>
    %228 = vector.broadcast %226 : vector<2x1xf32> to vector<2x8xf32>
    %229 = vector.broadcast %227 : vector<1x8xf32> to vector<2x8xf32>
    %230 = arith.mulf %228, %229 : vector<2x8xf32>
    %231 = arith.addf %200, %230 : vector<2x8xf32>
    %232 = vector.extract_strided_slice %0 {offsets = [0, 7, 0], sizes = [2, 1, 4], strides = [1, 1, 1]} : vector<2x8x4xf32> to vector<2x1x4xf32>
    %233 = vector.shape_cast %232 : vector<2x1x4xf32> to vector<2x4xf32>
    %cst_47 = arith.constant dense<0.000000e+00> : vector<2x128xf32>
    %234 = tpu.matmul %233, %1, %cst_47 {dimension_numbers = #tpu.dot_dimension_numbers<[1], [0], [0], [1], [0, 0, 1, 1], [], []>} : vector<2x4xf32>, vector<4x128xf32>, vector<2x128xf32> -> vector<2x128xf32>
    %235 = vector.broadcast %3 : vector<1x128xf32> to vector<2x128xf32>
    %236 = arith.addf %234, %235 : vector<2x128xf32>
    %cst_48 = arith.constant dense<0.000000e+00> : vector<2x128xf32>
    %237 = tpu.matmul %222, %2, %cst_48 {dimension_numbers = #tpu.dot_dimension_numbers<[1], [0], [0], [1], [0, 0, 1, 1], [], []>} : vector<2x32xf32>, vector<32x128xf32>, vector<2x128xf32> -> vector<2x128xf32>
    %238 = arith.addf %236, %237 : vector<2x128xf32>
    %239 = math.tanh %238 : vector<2x128xf32>
    %240 = vector.extract_strided_slice %239 {offsets = [0, 0], sizes = [2, 96], strides = [1, 1]} : vector<2x128xf32> to vector<2x96xf32>
    %cst_49 = arith.constant 1.000000e+00 : f32
    %241 = vector.broadcast %cst_49 : f32 to vector<2x96xf32>
    %242 = arith.addf %240, %241 : vector<2x96xf32>
    %cst_50 = arith.constant 5.000000e-01 : f32
    %243 = vector.broadcast %cst_50 : f32 to vector<2x96xf32>
    %244 = arith.mulf %243, %242 : vector<2x96xf32>
    %245 = vector.extract_strided_slice %244 {offsets = [0, 0], sizes = [2, 32], strides = [1, 1]} : vector<2x96xf32> to vector<2x32xf32>
    %246 = vector.extract_strided_slice %244 {offsets = [0, 32], sizes = [2, 32], strides = [1, 1]} : vector<2x96xf32> to vector<2x32xf32>
    %247 = vector.extract_strided_slice %244 {offsets = [0, 64], sizes = [2, 32], strides = [1, 1]} : vector<2x96xf32> to vector<2x32xf32>
    %248 = vector.extract_strided_slice %239 {offsets = [0, 96], sizes = [2, 32], strides = [1, 1]} : vector<2x128xf32> to vector<2x32xf32>
    %249 = arith.mulf %246, %220 : vector<2x32xf32>
    %250 = arith.mulf %245, %248 : vector<2x32xf32>
    %251 = arith.addf %249, %250 : vector<2x32xf32>
    %252 = math.tanh %251 : vector<2x32xf32>
    %253 = arith.mulf %247, %252 : vector<2x32xf32>
    %254 = vector.broadcast %4 : vector<1x32xf32> to vector<2x32xf32>
    %255 = arith.mulf %253, %254 : vector<2x32xf32>
    %cst_51 = arith.constant dense<0.000000e+00> : vector<2xf32>
    %256 = vector.multi_reduction <add>, %255, %cst_51 [1] : vector<2x32xf32> to vector<2xf32>
    %257 = vector.shape_cast %256 : vector<2xf32> to vector<2x1xf32>
    %258 = vector.extract_strided_slice %11 {offsets = [7, 0], sizes = [1, 8], strides = [1, 1]} : vector<8x8xf32> to vector<1x8xf32>
    %259 = vector.broadcast %257 : vector<2x1xf32> to vector<2x8xf32>
    %260 = vector.broadcast %258 : vector<1x8xf32> to vector<2x8xf32>
    %261 = arith.mulf %259, %260 : vector<2x8xf32>
    %262 = arith.addf %231, %261 : vector<2x8xf32>
    %cst_52 = arith.constant dense<0xFF800000> : vector<2xf32>
    %263 = vector.multi_reduction <maximumf>, %262, %cst_52 [1] : vector<2x8xf32> to vector<2xf32>
    %264 = vector.shape_cast %263 : vector<2xf32> to vector<2x1xf32>
    %265 = vector.broadcast %264 : vector<2x1xf32> to vector<2x8xf32>
    %266 = arith.subf %262, %265 : vector<2x8xf32>
    %267 = math.exp %266 : vector<2x8xf32>
    %cst_53 = arith.constant dense<0.000000e+00> : vector<2xf32>
    %268 = vector.multi_reduction <add>, %267, %cst_53 [1] : vector<2x8xf32> to vector<2xf32>
    %269 = vector.shape_cast %268 : vector<2xf32> to vector<2x1xf32>
    %270 = vector.broadcast %269 : vector<2x1xf32> to vector<2x8xf32>
    %271 = arith.divf %267, %270 : vector<2x8xf32>
    %c0_54 = arith.constant 0 : index
    %c0_55 = arith.constant 0 : index
    %272 = vector.load %arg5[%c0_54, %c0_55] : memref<2x8xf32, #tpu.memory_space<vmem>>, vector<2x8xf32>
    tpu.vector_store %arg5[%c0_54, %c0_55], %271 {strides = array<i32>} : memref<2x8xf32, #tpu.memory_space<vmem>>, vector<2x8xf32>,
    return
  }
}

</mosaic_0001>

<llo_original>
// kernel: tpu_custom_call.1
$region0: #{tpu_custom_call.1}
  #allocation0 [shape = 'u32[]', space=smem, size = 0x4, offset = 0x4, fixed_abs, tag = 'smem constant byte address 0x4 - core index']
  #allocation1 [shape = 'u32[144,128]{1,0:T(1,128)}', space=vmem, size = 0x12000, scoped, tag = 'internal scratch']
  %s0 = inlined_call_operand.vmem [shape: f32[2,8,4], index: 0, kind: input, shape index: {}]
  %s1 = inlined_call_operand.vmem [shape: f32[4,128], index: 1, kind: input, shape index: {}]
  %s2 = inlined_call_operand.hbm [shape: f32[32,128], index: 2, kind: input, shape index: {}]
  %s3 = inlined_call_operand.vmem [shape: f32[1,128], index: 3, kind: input, shape index: {}]
  %s4 = inlined_call_operand.vmem [shape: f32[1,32], index: 4, kind: input, shape index: {}]
  %s5 = inlined_call_operand.hbm [shape: f32[2,8], index: 5, kind: output, shape index: {}]
  %s6 = sld [smem:[#allocation0]]
  $region34: #{tpu_custom_call.1} parent=0
    _
  %s8 = ssub.s32 1, %s6
  %s9 = scalar_select 0, %s8, %s6
  $region1: #{tpu_custom_call.1} parent=0
    #allocation2 [shape = 'u8[16384]{0}', space=vmem, size = 0x4000, scoped, tag = 'input window, operand 2, single buffered']
    #allocation3 [shape = 's32[1]{0}', space=sflag, size = 0x4, scoped, tag = 'scoped memory for tpu_custom_call.1']
    #allocation4 [shape = 's32[1]{0}', space=sflag, size = 0x4, scoped, tag = 'scoped memory for tpu_custom_call.1']
    #allocation5 [shape = 'u8[1024]{0}', space=vmem, size = 0x400, scoped, tag = 'output window, operand 0, single buffered']
    %10 = vsyncpa [#allocation3], 0
    %11 = vsyncpa [#allocation4], 0
    // Predicated region
    $region2: #{tpu_custom_call.1} parent=1 // pred_check
      _
    $region3: #{tpu_custom_call.1} parent=1 // pred_check_branch
      %13 = sbr.rel (0) target = $region5
    $region4: #{tpu_custom_call.1} parent=1 // pred_region
      _
    $region5: #{tpu_custom_call.1} parent=1 // pred_fallthru
      _
    // Predicated region
    $region6: #{tpu_custom_call.1} parent=1 // pred_check
      _
    $region7: #{tpu_custom_call.1} parent=1 // pred_check_branch
      %15 = sbr.rel (0) target = $region9
    $region8: #{tpu_custom_call.1} parent=1 // pred_region
      _
    $region9: #{tpu_custom_call.1} parent=1 // pred_fallthru
      _
    // Predicated region
    $region10: #{tpu_custom_call.1} parent=1 // pred_check
      _
    $region11: #{tpu_custom_call.1} parent=1 // pred_check_branch
      %17 = sbr.rel (0) target = $region13
    $region12: #{tpu_custom_call.1} parent=1 // pred_region
      %s19 = ssub.s32 512, 512
      %20 = vsyncadd [#allocation3], %s19
      %s21 = sshll.u32 [#allocation2], 4
      %s22 = int_to_ptr.vmem [resolvable:$true] %s21
      %27 = dma.hbm_to_vmem [thread:$0]  %s2, 512, %s22, [#allocation3], 128, 128, 8
    $region13: #{tpu_custom_call.1} parent=1 // pred_fallthru
      _
    // Predicated region
    $region14: #{tpu_custom_call.1} parent=1 // pred_check
      _
    $region15: #{tpu_custom_call.1} parent=1 // pred_check_branch
      %29 = sbr.rel (0) target = $region17
    $region16: #{tpu_custom_call.1} parent=1 // pred_region
      _
    $region17: #{tpu_custom_call.1} parent=1 // pred_fallthru
      _
    // Predicated region
    $region18: #{tpu_custom_call.1} parent=1 // pred_check
      _
    $region19: #{tpu_custom_call.1} parent=1 // pred_check_branch
      %31 = sbr.rel (0) target = $region21
    $region20: #{tpu_custom_call.1} parent=1 // pred_region
      _
    $region21: #{tpu_custom_call.1} parent=1 // pred_fallthru
      _
    // Predicated region
    $region22: #{tpu_custom_call.1} parent=1 // pred_check
      _
    $region23: #{tpu_custom_call.1} parent=1 // pred_check_branch
      %33 = sbr.rel (0) target = $region25
    $region24: #{tpu_custom_call.1} parent=1 // pred_region
      %34 = dma.done [#allocation3], 512
    $region25: #{tpu_custom_call.1} parent=1 // pred_fallthru
      _
    %v35 = vld [vmem:[%s0] sm:$0xff]
    %v36 = vld [vmem:[%s0 + $0x8] sm:$0xff]
    %v37 = vld [vmem:[%s1] sm:$0xf]
    %v38 = vld [vmem:[#allocation2] sm:$0xff]
    %v39 = vld [vmem:[#allocation2 + $0x8] sm:$0xff]
    %v40 = vld [vmem:[#allocation2 + $0x10] sm:$0xff]
    %v41 = vld [vmem:[#allocation2 + $0x18] sm:$0xff]
    %v42 = vld [vmem:[%s3] sm:$0x1]
    %v43 = vld [vmem:[%s4] sm:$0x1]
    %v44 = vlaneseq
    %v45 = vshrl.u32 %v44, 7
    %v46 = vlaneseq
    %v47 = vand.u32 %v46, 127
    %vm48 = vcmp.eq.s32.totalorder %v45, %v47
    %v49 = vsel %vm48, 1, 0
    %v50 = vcvt.s32.f32 %v49
    %v52 = vlaneseq
    %v53 = vshrl.u32 %v52, 7
    %v54 = vsub.s32 0, %v53
    %v55 = vrot.slane %v42, %v54
    %v59 = vrot.slane %v36, 7
    %vm60 = vcmask 1041409
    %v61 = vsel %vm60, %v59, %v35
    %vm62 = vcmask 31744
    %v63 = vsel %vm62, %v61, 0
    %vm65 = vcmask 1043456
    %v67 = vsel %vm65, %v37, 0
    %69 = vmatprep.subr.mxu0 0.0
    %70 = vmatpush1.msra.mxu0 0.0
    %71 = vmatprep.subr.mxu0 0.0
    %72 = vmatpush1.msra.mxu0 0.0
    %73 = vmatprep.subr.mxu0 0.0
    %74 = vmatpush1.msra.mxu0 0.0
    %75 = vmatprep.subr.mxu0 0.0
    %76 = vmatpush1.msra.mxu0 0.0
    %77 = vmatprep.subr.mxu0 0.0
    %78 = vmatpush1.msra.mxu0 0.0
    %79 = vmatprep.subr.mxu0 0.0
    %80 = vmatpush1.msra.mxu0 0.0
    %81 = vmatprep.subr.mxu0 0.0
    %82 = vmatpush1.msra.mxu0 0.0
    %83 = vmatprep.subr.mxu0 0.0
    %84 = vmatpush1.msra.mxu0 0.0
    %85 = vmatprep.subr.mxu0 0.0
    %86 = vmatpush1.msra.mxu0 0.0
    %87 = vmatprep.subr.mxu0 0.0
    %88 = vmatpush1.msra.mxu0 0.0
    %89 = vmatprep.subr.mxu0 0.0
    %90 = vmatpush1.msra.mxu0 0.0
    %91 = vmatprep.subr.mxu0 0.0
    %92 = vmatpush1.msra.mxu0 0.0
    %93 = vmatprep.subr.mxu0 0.0
    %94 = vmatpush1.msra.mxu0 0.0
    %95 = vmatprep.subr.mxu0 0.0
    %96 = vmatpush1.msra.mxu0 0.0
    %97 = vmatprep.subr.mxu0 0.0
    %98 = vmatpush1.msra.mxu0 0.0
    %99 = vmatprep.subr.mxu0 0.0
    %100 = vmatpush1.msra.mxu0 %v67
    %101 = vmatprep.subr.mxu0 0.0
    %102 = vmatpush2.msra.mxu0 0.0
    %103 = vmatprep.subr.mxu0 0.0
    %104 = vmatpush2.msra.mxu0 0.0
    %105 = vmatprep.subr.mxu0 0.0
    %106 = vmatpush2.msra.mxu0 0.0
    %107 = vmatprep.subr.mxu0 0.0
    %108 = vmatpush2.msra.mxu0 0.0
    %109 = vmatprep.subr.mxu0 0.0
    %110 = vmatpush2.msra.mxu0 0.0
    %111 = vmatprep.subr.mxu0 0.0
    %112 = vmatpush2.msra.mxu0 0.0
    %113 = vmatprep.subr.mxu0 0.0
    %114 = vmatpush2.msra.mxu0 0.0
    %115 = vmatprep.subr.mxu0 0.0
    %116 = vmatpush2.msra.mxu0 0.0
    %117 = vmatprep.subr.mxu0 0.0
    %118 = vmatpush2.msra.mxu0 0.0
    %119 = vmatprep.subr.mxu0 0.0
    %120 = vmatpush2.msra.mxu0 0.0
    %121 = vmatprep.subr.mxu0 0.0
    %122 = vmatpush2.msra.mxu0 0.0
    %123 = vmatprep.subr.mxu0 0.0
    %124 = vmatpush2.msra.mxu0 0.0
    %125 = vmatprep.subr.mxu0 0.0
    %126 = vmatpush2.msra.mxu0 0.0
    %127 = vmatprep.subr.mxu0 0.0
    %128 = vmatpush2.msra.mxu0 0.0
    %129 = vmatprep.subr.mxu0 0.0
    %130 = vmatpush2.msra.mxu0 0.0
    %131 = vmatprep.subr.mxu0 0.0
    %132 = vmatpush2.msra.mxu0 0.0
    %133 = vmatprep.mubr.f32.mxu0 0.0
    %134 = vmatmul.mubr.f32.gmra.mxu0 %v63
    %v135 = vpop.f32.mrf.mxu0
    %v136 = vadd.f32 %v55, %v135
    %v137 = vpop.f32.mrf.mxu0
    %138 = vdwg.mxu0
    %vm139 = vcmask 261120
    %v141 = vsel %vm139, 0.0, 0
    %143 = vmatprep.subr.mxu0 0.0
    %144 = vmatpush1.msra.mxu0 0.0
    %145 = vmatprep.subr.mxu0 0.0
    %146 = vmatpush1.msra.mxu0 0.0
    %147 = vmatprep.subr.mxu0 0.0
    %148 = vmatpush1.msra.mxu0 0.0
    %149 = vmatprep.subr.mxu0 0.0
    %150 = vmatpush1.msra.mxu0 0.0
    %151 = vmatprep.subr.mxu0 0.0
    %152 = vmatpush1.msra.mxu0 0.0
    %153 = vmatprep.subr.mxu0 0.0
    %154 = vmatpush1.msra.mxu0 0.0
    %155 = vmatprep.subr.mxu0 0.0
    %156 = vmatpush1.msra.mxu0 0.0
    %157 = vmatprep.subr.mxu0 0.0
    %158 = vmatpush1.msra.mxu0 0.0
    %159 = vmatprep.subr.mxu0 0.0
    %160 = vmatpush1.msra.mxu0 0.0
    %161 = vmatprep.subr.mxu0 0.0
    %162 = vmatpush1.msra.mxu0 0.0
    %163 = vmatprep.subr.mxu0 0.0
    %164 = vmatpush1.msra.mxu0 0.0
    %165 = vmatprep.subr.mxu0 0.0
    %166 = vmatpush1.msra.mxu0 0.0
    %167 = vmatprep.subr.mxu0 0.0
    %168 = vmatpush1.msra.mxu0 %v41
    %169 = vmatprep.subr.mxu0 0.0
    %170 = vmatpush1.msra.mxu0 %v40
    %171 = vmatprep.subr.mxu0 0.0
    %172 = vmatpush1.msra.mxu0 %v39
    %173 = vmatprep.subr.mxu0 0.0
    %174 = vmatpush1.msra.mxu0 %v38
    %175 = vmatprep.subr.mxu0 0.0
    %176 = vmatpush2.msra.mxu0 0.0
    %177 = vmatprep.subr.mxu0 0.0
    %178 = vmatpush2.msra.mxu0 0.0
    %179 = vmatprep.subr.mxu0 0.0
    %180 = vmatpush2.msra.mxu0 0.0
    %181 = vmatprep.subr.mxu0 0.0
    %182 = vmatpush2.msra.mxu0 0.0
    %183 = vmatprep.subr.mxu0 0.0
    %184 = vmatpush2.msra.mxu0 0.0
    %185 = vmatprep.subr.mxu0 0.0
    %186 = vmatpush2.msra.mxu0 0.0
    %187 = vmatprep.subr.mxu0 0.0
    %188 = vmatpush2.msra.mxu0 0.0
    %189 = vmatprep.subr.mxu0 0.0
    %190 = vmatpush2.msra.mxu0 0.0
    %191 = vmatprep.subr.mxu0 0.0
    %192 = vmatpush2.msra.mxu0 0.0
    %193 = vmatprep.subr.mxu0 0.0
    %194 = vmatpush2.msra.mxu0 0.0
    %195 = vmatprep.subr.mxu0 0.0
    %196 = vmatpush2.msra.mxu0 0.0
    %197 = vmatprep.subr.mxu0 0.0
    %198 = vmatpush2.msra.mxu0 0.0
    %199 = vmatprep.subr.mxu0 0.0
    %200 = vmatpush2.msra.mxu0 0.0
    %201 = vmatprep.subr.mxu0 0.0
    %202 = vmatpush2.msra.mxu0 0.0
    %203 = vmatprep.subr.mxu0 0.0
    %204 = vmatpush2.msra.mxu0 0.0
    %205 = vmatprep.subr.mxu0 0.0
    %206 = vmatpush2.msra.mxu0 0.0
    %207 = vmatprep.mubr.f32.mxu0 0.0
    %208 = vmatmul.mubr.f32.gmra.mxu0 %v141
    %v209 = vpop.f32.mrf.mxu0
    %v210 = vadd.f32 0.0, %v209
    %v211 = vpop.f32.mrf.mxu0
    %212 = vdwg.mxu0
    %v213 = vadd.f32 %v136, %v210
    %v214 = vtanh.pop %v213
    %v215 = vadd.f32 %v214, 1.0
    %v216 = vmul.f32 %v215, 0.5
    %v217 = vmul.f32 %v216, 0.0
    %219 = vrot.lane.b32.xlu0 %v214, 32
    %v220 = vpop.permute.xlu0 %219
    %v222 = vmul.f32 %v216, %v220
    %224 = vrot.lane.b32.xlu0 %v222, 32
    %v225 = vpop.permute.xlu0 %224
    %v227 = vadd.f32 %v217, %v225
    %v228 = vtanh.pop %v227
    %230 = vrot.lane.b32.xlu0 %v228, 32
    %v231 = vpop.permute.xlu0 %230
    %v233 = vmul.f32 %v216, %v231
    %v235 = vlaneseq
    %v236 = vshrl.u32 %v235, 7
    %v237 = vsub.s32 0, %v236
    %v238 = vrot.slane %v43, %v237
    %239 = vrot.lane.b32.xlu0 %v238, 64
    %v240 = vpop.permute.xlu0 %239
    %v242 = vmul.f32 %v233, %v240
    %244 = vrot.lane.b32.xlu0 %v242, 64
    %v245 = vpop.permute.xlu0 %244
    %vm247 = vcmask 254976
    %v248 = vsel %vm247, %v245, 0.0
    %249 = vadd.xlane.f32.xlu0 %v248
    %v250 = vpop.xlane.xlu0 %249
    %v251 = vlaneseq
    %v252 = vshrl.u32 %v251, 7
    %v253 = vsub.s32 0, %v252
    %v254 = vrot.slane %v50, %v253
    %v255 = vmul.f32 %v250, %v254
    %v256 = vadd.f32 %v255, 0.0
    %v257 = vrot.slane %v35, 1
    %v258 = vsel %vm60, %v36, %v257
    %v259 = vsel %vm62, %v258, 0
    %261 = vmatprep.subr.mxu0 0.0
    %262 = vmatpush1.msra.mxu0 0.0
    %263 = vmatprep.subr.mxu0 0.0
    %264 = vmatpush1.msra.mxu0 0.0
    %265 = vmatprep.subr.mxu0 0.0
    %266 = vmatpush1.msra.mxu0 0.0
    %267 = vmatprep.subr.mxu0 0.0
    %268 = vmatpush1.msra.mxu0 0.0
    %269 = vmatprep.subr.mxu0 0.0
    %270 = vmatpush1.msra.mxu0 0.0
    %271 = vmatprep.subr.mxu0 0.0
    %272 = vmatpush1.msra.mxu0 0.0
    %273 = vmatprep.subr.mxu0 0.0
    %274 = vmatpush1.msra.mxu0 0.0
    %275 = vmatprep.subr.mxu0 0.0
    %276 = vmatpush1.msra.mxu0 0.0
    %277 = vmatprep.subr.mxu0 0.0
    %278 = vmatpush1.msra.mxu0 0.0
    %279 = vmatprep.subr.mxu0 0.0
    %280 = vmatpush1.msra.mxu0 0.0
    %281 = vmatprep.subr.mxu0 0.0
    %282 = vmatpush1.msra.mxu0 0.0
    %283 = vmatprep.subr.mxu0 0.0
    %284 = vmatpush1.msra.mxu0 0.0
    %285 = vmatprep.subr.mxu0 0.0
    %286 = vmatpush1.msra.mxu0 0.0
    %287 = vmatprep.subr.mxu0 0.0
    %288 = vmatpush1.msra.mxu0 0.0
    %289 = vmatprep.subr.mxu0 0.0
    %290 = vmatpush1.msra.mxu0 0.0
    %291 = vmatprep.subr.mxu0 0.0
    %292 = vmatpush1.msra.mxu0 %v67
    %293 = vmatprep.subr.mxu0 0.0
    %294 = vmatpush2.msra.mxu0 0.0
    %295 = vmatprep.subr.mxu0 0.0
    %296 = vmatpush2.msra.mxu0 0.0
    %297 = vmatprep.subr.mxu0 0.0
    %298 = vmatpush2.msra.mxu0 0.0
    %299 = vmatprep.subr.mxu0 0.0
    %300 = vmatpush2.msra.mxu0 0.0
    %301 = vmatprep.subr.mxu0 0.0
    %302 = vmatpush2.msra.mxu0 0.0
    %303 = vmatprep.subr.mxu0 0.0
    %304 = vmatpush2.msra.mxu0 0.0
    %305 = vmatprep.subr.mxu0 0.0
    %306 = vmatpush2.msra.mxu0 0.0
    %307 = vmatprep.subr.mxu0 0.0
    %308 = vmatpush2.msra.mxu0 0.0
    %309 = vmatprep.subr.mxu0 0.0
    %310 = vmatpush2.msra.mxu0 0.0
    %311 = vmatprep.subr.mxu0 0.0
    %312 = vmatpush2.msra.mxu0 0.0
    %313 = vmatprep.subr.mxu0 0.0
    %314 = vmatpush2.msra.mxu0 0.0
    %315 = vmatprep.subr.mxu0 0.0
    %316 = vmatpush2.msra.mxu0 0.0
    %317 = vmatprep.subr.mxu0 0.0
    %318 = vmatpush2.msra.mxu0 0.0
    %319 = vmatprep.subr.mxu0 0.0
    %320 = vmatpush2.msra.mxu0 0.0
    %321 = vmatprep.subr.mxu0 0.0
    %322 = vmatpush2.msra.mxu0 0.0
    %323 = vmatprep.subr.mxu0 0.0
    %324 = vmatpush2.msra.mxu0 0.0
    %325 = vmatprep.mubr.f32.mxu0 0.0
    %326 = vmatmul.mubr.f32.gmra.mxu0 %v259
    %v327 = vpop.f32.mrf.mxu0
    %v328 = vadd.f32 %v55, %v327
    %v329 = vpop.f32.mrf.mxu0
    %330 = vdwg.mxu0
    %332 = vrot.lane.b32.xlu0 %v233, 64
    %v333 = vpop.permute.xlu0 %332
    %v334 = vsel %vm139, %v333, 0
    %336 = vmatprep.subr.mxu0 0.0
    %337 = vmatpush1.msra.mxu0 0.0
    %338 = vmatprep.subr.mxu0 0.0
    %339 = vmatpush1.msra.mxu0 0.0
    %340 = vmatprep.subr.mxu0 0.0
    %341 = vmatpush1.msra.mxu0 0.0
    %342 = vmatprep.subr.mxu0 0.0
    %343 = vmatpush1.msra.mxu0 0.0
    %344 = vmatprep.subr.mxu0 0.0
    %345 = vmatpush1.msra.mxu0 0.0
    %346 = vmatprep.subr.mxu0 0.0
    %347 = vmatpush1.msra.mxu0 0.0
    %348 = vmatprep.subr.mxu0 0.0
    %349 = vmatpush1.msra.mxu0 0.0
    %350 = vmatprep.subr.mxu0 0.0
    %351 = vmatpush1.msra.mxu0 0.0
    %352 = vmatprep.subr.mxu0 0.0
    %353 = vmatpush1.msra.mxu0 0.0
    %354 = vmatprep.subr.mxu0 0.0
    %355 = vmatpush1.msra.mxu0 0.0
    %356 = vmatprep.subr.mxu0 0.0
    %357 = vmatpush1.msra.mxu0 0.0
    %358 = vmatprep.subr.mxu0 0.0
    %359 = vmatpush1.msra.mxu0 0.0
    %360 = vmatprep.subr.mxu0 0.0
    %361 = vmatpush1.msra.mxu0 %v41
    %362 = vmatprep.subr.mxu0 0.0
    %363 = vmatpush1.msra.mxu0 %v40
    %364 = vmatprep.subr.mxu0 0.0
    %365 = vmatpush1.msra.mxu0 %v39
    %366 = vmatprep.subr.mxu0 0.0
    %367 = vmatpush1.msra.mxu0 %v38
    %368 = vmatprep.subr.mxu0 0.0
    %369 = vmatpush2.msra.mxu0 0.0
    %370 = vmatprep.subr.mxu0 0.0
    %371 = vmatpush2.msra.mxu0 0.0
    %372 = vmatprep.subr.mxu0 0.0
    %373 = vmatpush2.msra.mxu0 0.0
    %374 = vmatprep.subr.mxu0 0.0
    %375 = vmatpush2.msra.mxu0 0.0
    %376 = vmatprep.subr.mxu0 0.0
    %377 = vmatpush2.msra.mxu0 0.0
    %378 = vmatprep.subr.mxu0 0.0
    %379 = vmatpush2.msra.mxu0 0.0
    %380 = vmatprep.subr.mxu0 0.0
    %381 = vmatpush2.msra.mxu0 0.0
    %382 = vmatprep.subr.mxu0 0.0
    %383 = vmatpush2.msra.mxu0 0.0
    %384 = vmatprep.subr.mxu0 0.0
    %385 = vmatpush2.msra.mxu0 0.0
    %386 = vmatprep.subr.mxu0 0.0
    %387 = vmatpush2.msra.mxu0 0.0
    %388 = vmatprep.subr.mxu0 0.0
    %389 = vmatpush2.msra.mxu0 0.0
    %390 = vmatprep.subr.mxu0 0.0
    %391 = vmatpush2.msra.mxu0 0.0
    %392 = vmatprep.subr.mxu0 0.0
    %393 = vmatpush2.msra.mxu0 0.0
    %394 = vmatprep.subr.mxu0 0.0
    %395 = vmatpush2.msra.mxu0 0.0
    %396 = vmatprep.subr.mxu0 0.0
    %397 = vmatpush2.msra.mxu0 0.0
    %398 = vmatprep.subr.mxu0 0.0
    %399 = vmatpush2.msra.mxu0 0.0
    %400 = vmatprep.mubr.f32.mxu0 0.0
    %401 = vmatmul.mubr.f32.gmra.mxu0 %v334
    %v402 = vpop.f32.mrf.mxu0
    %v403 = vadd.f32 0.0, %v402
    %v404 = vpop.f32.mrf.mxu0
    %405 = vdwg.mxu0
    %v406 = vadd.f32 %v328, %v403
    %v407 = vtanh.pop %v406
    %v408 = vadd.f32 %v407, 1.0
    %v409 = vmul.f32 %v408, 0.5
    %v410 = vmul.f32 %v409, %v227
    %412 = vrot.lane.b32.xlu0 %v407, 32
    %v413 = vpop.permute.xlu0 %412
    %v415 = vmul.f32 %v409, %v413
    %417 = vrot.lane.b32.xlu0 %v415, 32
    %v418 = vpop.permute.xlu0 %417
    %v420 = vadd.f32 %v410, %v418
    %v421 = vtanh.pop %v420
    %423 = vrot.lane.b32.xlu0 %v421, 32
    %v424 = vpop.permute.xlu0 %423
    %v426 = vmul.f32 %v409, %v424
    %v427 = vmul.f32 %v426, %v240
    %429 = vrot.lane.b32.xlu0 %v427, 64
    %v430 = vpop.permute.xlu0 %429
    %v432 = vsel %vm247, %v430, 0.0
    %433 = vadd.xlane.f32.xlu0 %v432
    %v434 = vpop.xlane.xlu0 %433
    %v435 = vlaneseq
    %v436 = vshrl.u32 %v435, 7
    %v437 = vsub.s32 1, %v436
    %v438 = vrot.slane %v50, %v437
    %v439 = vmul.f32 %v434, %v438
    %v440 = vadd.f32 %v256, %v439
    %v441 = vrot.slane %v35, 2
    %v442 = vrot.slane %v36, 1
    %v443 = vsel %vm60, %v442, %v441
    %v444 = vsel %vm62, %v443, 0
    %446 = vmatprep.subr.mxu0 0.0
    %447 = vmatpush1.msra.mxu0 0.0
    %448 = vmatprep.subr.mxu0 0.0
    %449 = vmatpush1.msra.mxu0 0.0
    %450 = vmatprep.subr.mxu0 0.0
    %451 = vmatpush1.msra.mxu0 0.0
    %452 = vmatprep.subr.mxu0 0.0
    %453 = vmatpush1.msra.mxu0 0.0
    %454 = vmatprep.subr.mxu0 0.0
    %455 = vmatpush1.msra.mxu0 0.0
    %456 = vmatprep.subr.mxu0 0.0
    %457 = vmatpush1.msra.mxu0 0.0
    %458 = vmatprep.subr.mxu0 0.0
    %459 = vmatpush1.msra.mxu0 0.0
    %460 = vmatprep.subr.mxu0 0.0
    %461 = vmatpush1.msra.mxu0 0.0
    %462 = vmatprep.subr.mxu0 0.0
    %463 = vmatpush1.msra.mxu0 0.0
    %464 = vmatprep.subr.mxu0 0.0
    %465 = vmatpush1.msra.mxu0 0.0
    %466 = vmatprep.subr.mxu0 0.0
    %467 = vmatpush1.msra.mxu0 0.0
    %468 = vmatprep.subr.mxu0 0.0
    %469 = vmatpush1.msra.mxu0 0.0
    %470 = vmatprep.subr.mxu0 0.0
    %471 = vmatpush1.msra.mxu0 0.0
    %472 = vmatprep.subr.mxu0 0.0
    %473 = vmatpush1.msra.mxu0 0.0
    %474 = vmatprep.subr.mxu0 0.0
    %475 = vmatpush1.msra.mxu0 0.0
    %476 = vmatprep.subr.mxu0 0.0
    %477 = vmatpush1.msra.mxu0 %v67
    %478 = vmatprep.subr.mxu0 0.0
    %479 = vmatpush2.msra.mxu0 0.0
    %480 = vmatprep.subr.mxu0 0.0
    %481 = vmatpush2.msra.mxu0 0.0
    %482 = vmatprep.subr.mxu0 0.0
    %483 = vmatpush2.msra.mxu0 0.0
    %484 = vmatprep.subr.mxu0 0.0
    %485 = vmatpush2.msra.mxu0 0.0
    %486 = vmatprep.subr.mxu0 0.0
    %487 = vmatpush2.msra.mxu0 0.0
    %488 = vmatprep.subr.mxu0 0.0
    %489 = vmatpush2.msra.mxu0 0.0
    %490 = vmatprep.subr.mxu0 0.0
    %491 = vmatpush2.msra.mxu0 0.0
    %492 = vmatprep.subr.mxu0 0.0
    %493 = vmatpush2.msra.mxu0 0.0
    %494 = vmatprep.subr.mxu0 0.0
    %495 = vmatpush2.msra.mxu0 0.0
    %496 = vmatprep.subr.mxu0 0.0
    %497 = vmatpush2.msra.mxu0 0.0
    %498 = vmatprep.subr.mxu0 0.0
    %499 = vmatpush2.msra.mxu0 0.0
    %500 = vmatprep.subr.mxu0 0.0
    %501 = vmatpush2.msra.mxu0 0.0
    %502 = vmatprep.subr.mxu0 0.0
    %503 = vmatpush2.msra.mxu0 0.0
    %504 = vmatprep.subr.mxu0 0.0
    %505 = vmatpush2.msra.mxu0 0.0
    %506 = vmatprep.subr.mxu0 0.0
    %507 = vmatpush2.msra.mxu0 0.0
    %508 = vmatprep.subr.mxu0 0.0
    %509 = vmatpush2.msra.mxu0 0.0
    %510 = vmatprep.mubr.f32.mxu0 0.0
    %511 = vmatmul.mubr.f32.gmra.mxu0 %v444
    %v512 = vpop.f32.mrf.mxu0
    %v513 = vadd.f32 %v55, %v512
    %v514 = vpop.f32.mrf.mxu0
    %515 = vdwg.mxu0
    %517 = vrot.lane.b32.xlu0 %v426, 64
    %v518 = vpop.permute.xlu0 %517
    %v519 = vsel %vm139, %v518, 0
    %521 = vmatprep.subr.mxu0 0.0
    %522 = vmatpush1.msra.mxu0 0.0
    %523 = vmatprep.subr.mxu0 0.0
    %524 = vmatpush1.msra.mxu0 0.0
    %525 = vmatprep.subr.mxu0 0.0
    %526 = vmatpush1.msra.mxu0 0.0
    %527 = vmatprep.subr.mxu0 0.0
    %528 = vmatpush1.msra.mxu0 0.0
    %529 = vmatprep.subr.mxu0 0.0
    %530 = vmatpush1.msra.mxu0 0.0
    %531 = vmatprep.subr.mxu0 0.0
    %532 = vmatpush1.msra.mxu0 0.0
    %533 = vmatprep.subr.mxu0 0.0
    %534 = vmatpush1.msra.mxu0 0.0
    %535 = vmatprep.subr.mxu0 0.0
    %536 = vmatpush1.msra.mxu0 0.0
    %537 = vmatprep.subr.mxu0 0.0
    %538 = vmatpush1.msra.mxu0 0.0
    %539 = vmatprep.subr.mxu0 0.0
    %540 = vmatpush1.msra.mxu0 0.0
    %541 = vmatprep.subr.mxu0 0.0
    %542 = vmatpush1.msra.mxu0 0.0
    %543 = vmatprep.subr.mxu0 0.0
    %544 = vmatpush1.msra.mxu0 0.0
    %545 = vmatprep.subr.mxu0 0.0
    %546 = vmatpush1.msra.mxu0 %v41
    %547 = vmatprep.subr.mxu0 0.0
    %548 = vmatpush1.msra.mxu0 %v40
    %549 = vmatprep.subr.mxu0 0.0
    %550 = vmatpush1.msra.mxu0 %v39
    %551 = vmatprep.subr.mxu0 0.0
    %552 = vmatpush1.msra.mxu0 %v38
    %553 = vmatprep.subr.mxu0 0.0
    %554 = vmatpush2.msra.mxu0 0.0
    %555 = vmatprep.subr.mxu0 0.0
    %556 = vmatpush2.msra.mxu0 0.0
    %557 = vmatprep.subr.mxu0 0.0
    %558 = vmatpush2.msra.mxu0 0.0
    %559 = vmatprep.subr.mxu0 0.0
    %560 = vmatpush2.msra.mxu0 0.0
    %561 = vmatprep.subr.mxu0 0.0
    %562 = vmatpush2.msra.mxu0 0.0
    %563 = vmatprep.subr.mxu0 0.0
    %564 = vmatpush2.msra.mxu0 0.0
    %565 = vmatprep.subr.mxu0 0.0
    %566 = vmatpush2.msra.mxu0 0.0
    %567 = vmatprep.subr.mxu0 0.0
    %568 = vmatpush2.msra.mxu0 0.0
    %569 = vmatprep.subr.mxu0 0.0
    %570 = vmatpush2.msra.mxu0 0.0
    %571 = vmatprep.subr.mxu0 0.0
    %572 = vmatpush2.msra.mxu0 0.0
    %573 = vmatprep.subr.mxu0 0.0
    %574 = vmatpush2.msra.mxu0 0.0
    %575 = vmatprep.subr.mxu0 0.0
    %576 = vmatpush2.msra.mxu0 0.0
    %577 = vmatprep.subr.mxu0 0.0
    %578 = vmatpush2.msra.mxu0 0.0
    %579 = vmatprep.subr.mxu0 0.0
    %580 = vmatpush2.msra.mxu0 0.0
    %581 = vmatprep.subr.mxu0 0.0
    %582 = vmatpush2.msra.mxu0 0.0
    %583 = vmatprep.subr.mxu0 0.0
    %584 = vmatpush2.msra.mxu0 0.0
    %585 = vmatprep.mubr.f32.mxu0 0.0
    %586 = vmatmul.mubr.f32.gmra.mxu0 %v519
    %v587 = vpop.f32.mrf.mxu0
    %v588 = vadd.f32 0.0, %v587
    %v589 = vpop.f32.mrf.mxu0
    %590 = vdwg.mxu0
    %v591 = vadd.f32 %v513, %v588
    %v592 = vtanh.pop %v591
    %v593 = vadd.f32 %v592, 1.0
    %v594 = vmul.f32 %v593, 0.5
    %v595 = vmul.f32 %v594, %v420
    %597 = vrot.lane.b32.xlu0 %v592, 32
    %v598 = vpop.permute.xlu0 %597
    %v600 = vmul.f32 %v594, %v598
    %602 = vrot.lane.b32.xlu0 %v600, 32
    %v603 = vpop.permute.xlu0 %602
    %v605 = vadd.f32 %v595, %v603
    %v606 = vtanh.pop %v605
    %608 = vrot.lane.b32.xlu0 %v606, 32
    %v609 = vpop.permute.xlu0 %608
    %v611 = vmul.f32 %v594, %v609
    %v612 = vmul.f32 %v611, %v240
    %614 = vrot.lane.b32.xlu0 %v612, 64
    %v615 = vpop.permute.xlu0 %614
    %v617 = vsel %vm247, %v615, 0.0
    %618 = vadd.xlane.f32.xlu0 %v617
    %v619 = vpop.xlane.xlu0 %618
    %v620 = vlaneseq
    %v621 = vshrl.u32 %v620, 7
    %v622 = vsub.s32 2, %v621
    %v623 = vrot.slane %v50, %v622
    %v624 = vmul.f32 %v619, %v623
    %v625 = vadd.f32 %v440, %v624
    %v626 = vrot.slane %v35, 3
    %v627 = vrot.slane %v36, 2
    %v628 = vsel %vm60, %v627, %v626
    %v629 = vsel %vm62, %v628, 0
    %631 = vmatprep.subr.mxu0 0.0
    %632 = vmatpush1.msra.mxu0 0.0
    %633 = vmatprep.subr.mxu0 0.0
    %634 = vmatpush1.msra.mxu0 0.0
    %635 = vmatprep.subr.mxu0 0.0
    %636 = vmatpush1.msra.mxu0 0.0
    %637 = vmatprep.subr.mxu0 0.0
    %638 = vmatpush1.msra.mxu0 0.0
    %639 = vmatprep.subr.mxu0 0.0
    %640 = vmatpush1.msra.mxu0 0.0
    %641 = vmatprep.subr.mxu0 0.0
    %642 = vmatpush1.msra.mxu0 0.0
    %643 = vmatprep.subr.mxu0 0.0
    %644 = vmatpush1.msra.mxu0 0.0
    %645 = vmatprep.subr.mxu0 0.0
    %646 = vmatpush1.msra.mxu0 0.0
    %647 = vmatprep.subr.mxu0 0.0
    %648 = vmatpush1.msra.mxu0 0.0
    %649 = vmatprep.subr.mxu0 0.0
    %650 = vmatpush1.msra.mxu0 0.0
    %651 = vmatprep.subr.mxu0 0.0
    %652 = vmatpush1.msra.mxu0 0.0
    %653 = vmatprep.subr.mxu0 0.0
    %654 = vmatpush1.msra.mxu0 0.0
    %655 = vmatprep.subr.mxu0 0.0
    %656 = vmatpush1.msra.mxu0 0.0
    %657 = vmatprep.subr.mxu0 0.0
    %658 = vmatpush1.msra.mxu0 0.0
    %659 = vmatprep.subr.mxu0 0.0
    %660 = vmatpush1.msra.mxu0 0.0
    %661 = vmatprep.subr.mxu0 0.0
    %662 = vmatpush1.msra.mxu0 %v67
    %663 = vmatprep.subr.mxu0 0.0
    %664 = vmatpush2.msra.mxu0 0.0
    %665 = vmatprep.subr.mxu0 0.0
    %666 = vmatpush2.msra.mxu0 0.0
    %667 = vmatprep.subr.mxu0 0.0
    %668 = vmatpush2.msra.mxu0 0.0
    %669 = vmatprep.subr.mxu0 0.0
    %670 = vmatpush2.msra.mxu0 0.0
    %671 = vmatprep.subr.mxu0 0.0
    %672 = vmatpush2.msra.mxu0 0.0
    %673 = vmatprep.subr.mxu0 0.0
    %674 = vmatpush2.msra.mxu0 0.0
    %675 = vmatprep.subr.mxu0 0.0
    %676 = vmatpush2.msra.mxu0 0.0
    %677 = vmatprep.subr.mxu0 0.0
    %678 = vmatpush2.msra.mxu0 0.0
    %679 = vmatprep.subr.mxu0 0.0
    %680 = vmatpush2.msra.mxu0 0.0
    %681 = vmatprep.subr.mxu0 0.0
    %682 = vmatpush2.msra.mxu0 0.0
    %683 = vmatprep.subr.mxu0 0.0
    %684 = vmatpush2.msra.mxu0 0.0
    %685 = vmatprep.subr.mxu0 0.0
    %686 = vmatpush2.msra.mxu0 0.0
    %687 = vmatprep.subr.mxu0 0.0
    %688 = vmatpush2.msra.mxu0 0.0
    %689 = vmatprep.subr.mxu0 0.0
    %690 = vmatpush2.msra.mxu0 0.0
    %691 = vmatprep.subr.mxu0 0.0
    %692 = vmatpush2.msra.mxu0 0.0
    %693 = vmatprep.subr.mxu0 0.0
    %694 = vmatpush2.msra.mxu0 0.0
    %695 = vmatprep.mubr.f32.mxu0 0.0
    %696 = vmatmul.mubr.f32.gmra.mxu0 %v629
    %v697 = vpop.f32.mrf.mxu0
    %v698 = vadd.f32 %v55, %v697
    %v699 = vpop.f32.mrf.mxu0
    %700 = vdwg.mxu0
    %702 = vrot.lane.b32.xlu0 %v611, 64
    %v703 = vpop.permute.xlu0 %702
    %v704 = vsel %vm139, %v703, 0
    %706 = vmatprep.subr.mxu0 0.0
    %707 = vmatpush1.msra.mxu0 0.0
    %708 = vmatprep.subr.mxu0 0.0
    %709 = vmatpush1.msra.mxu0 0.0
    %710 = vmatprep.subr.mxu0 0.0
    %711 = vmatpush1.msra.mxu0 0.0
    %712 = vmatprep.subr.mxu0 0.0
    %713 = vmatpush1.msra.mxu0 0.0
    %714 = vmatprep.subr.mxu0 0.0
    %715 = vmatpush1.msra.mxu0 0.0
    %716 = vmatprep.subr.mxu0 0.0
    %717 = vmatpush1.msra.mxu0 0.0
    %718 = vmatprep.subr.mxu0 0.0
    %719 = vmatpush1.msra.mxu0 0.0
    %720 = vmatprep.subr.mxu0 0.0
    %721 = vmatpush1.msra.mxu0 0.0
    %722 = vmatprep.subr.mxu0 0.0
    %723 = vmatpush1.msra.mxu0 0.0
    %724 = vmatprep.subr.mxu0 0.0
    %725 = vmatpush1.msra.mxu0 0.0
    %726 = vmatprep.subr.mxu0 0.0
    %727 = vmatpush1.msra.mxu0 0.0
    %728 = vmatprep.subr.mxu0 0.0
    %729 = vmatpush1.msra.mxu0 0.0
    %730 = vmatprep.subr.mxu0 0.0
    %731 = vmatpush1.msra.mxu0 %v41
    %732 = vmatprep.subr.mxu0 0.0
    %733 = vmatpush1.msra.mxu0 %v40
    %734 = vmatprep.subr.mxu0 0.0
    %735 = vmatpush1.msra.mxu0 %v39
    %736 = vmatprep.subr.mxu0 0.0
    %737 = vmatpush1.msra.mxu0 %v38
    %738 = vmatprep.subr.mxu0 0.0
    %739 = vmatpush2.msra.mxu0 0.0
    %740 = vmatprep.subr.mxu0 0.0
    %741 = vmatpush2.msra.mxu0 0.0
    %742 = vmatprep.subr.mxu0 0.0
    %743 = vmatpush2.msra.mxu0 0.0
    %744 = vmatprep.subr.mxu0 0.0
    %745 = vmatpush2.msra.mxu0 0.0
    %746 = vmatprep.subr.mxu0 0.0
    %747 = vmatpush2.msra.mxu0 0.0
    %748 = vmatprep.subr.mxu0 0.0
    %749 = vmatpush2.msra.mxu0 0.0
    %750 = vmatprep.subr.mxu0 0.0
    %751 = vmatpush2.msra.mxu0 0.0
    %752 = vmatprep.subr.mxu0 0.0
    %753 = vmatpush2.msra.mxu0 0.0
    %754 = vmatprep.subr.mxu0 0.0
    %755 = vmatpush2.msra.mxu0 0.0
    %756 = vmatprep.subr.mxu0 0.0
    %757 = vmatpush2.msra.mxu0 0.0
    %758 = vmatprep.subr.mxu0 0.0
    %759 = vmatpush2.msra.mxu0 0.0
    %760 = vmatprep.subr.mxu0 0.0
    %761 = vmatpush2.msra.mxu0 0.0
    %762 = vmatprep.subr.mxu0 0.0
    %763 = vmatpush2.msra.mxu0 0.0
    %764 = vmatprep.subr.mxu0 0.0
    %765 = vmatpush2.msra.mxu0 0.0
    %766 = vmatprep.subr.mxu0 0.0
    %767 = vmatpush2.msra.mxu0 0.0
    %768 = vmatprep.subr.mxu0 0.0
    %769 = vmatpush2.msra.mxu0 0.0
    %770 = vmatprep.mubr.f32.mxu0 0.0
    %771 = vmatmul.mubr.f32.gmra.mxu0 %v704
    %v772 = vpop.f32.mrf.mxu0
    %v773 = vadd.f32 0.0, %v772
    %v774 = vpop.f32.mrf.mxu0
    %775 = vdwg.mxu0
    %v776 = vadd.f32 %v698, %v773
    %v777 = vtanh.pop %v776
    %v778 = vadd.f32 %v777, 1.0
    %v779 = vmul.f32 %v778, 0.5
    %v780 = vmul.f32 %v779, %v605
    %782 = vrot.lane.b32.xlu0 %v777, 32
    %v783 = vpop.permute.xlu0 %782
    %v785 = vmul.f32 %v779, %v783
    %787 = vrot.lane.b32.xlu0 %v785, 32
    %v788 = vpop.permute.xlu0 %787
    %v790 = vadd.f32 %v780, %v788
    %v791 = vtanh.pop %v790
    %793 = vrot.lane.b32.xlu0 %v791, 32
    %v794 = vpop.permute.xlu0 %793
    %v796 = vmul.f32 %v779, %v794
    %v797 = vmul.f32 %v796, %v240
    %799 = vrot.lane.b32.xlu0 %v797, 64
    %v800 = vpop.permute.xlu0 %799
    %v802 = vsel %vm247, %v800, 0.0
    %803 = vadd.xlane.f32.xlu0 %v802
    %v804 = vpop.xlane.xlu0 %803
    %v805 = vlaneseq
    %v806 = vshrl.u32 %v805, 7
    %v807 = vsub.s32 3, %v806
    %v808 = vrot.slane %v50, %v807
    %v809 = vmul.f32 %v804, %v808
    %v810 = vadd.f32 %v625, %v809
    %v811 = vrot.slane %v35, 4
    %v812 = vrot.slane %v36, 3
    %v813 = vsel %vm60, %v812, %v811
    %v814 = vsel %vm62, %v813, 0
    %816 = vmatprep.subr.mxu0 0.0
    %817 = vmatpush1.msra.mxu0 0.0
    %818 = vmatprep.subr.mxu0 0.0
    %819 = vmatpush1.msra.mxu0 0.0
    %820 = vmatprep.subr.mxu0 0.0
    %821 = vmatpush1.msra.mxu0 0.0
    %822 = vmatprep.subr.mxu0 0.0
    %823 = vmatpush1.msra.mxu0 0.0
    %824 = vmatprep.subr.mxu0 0.0
    %825 = vmatpush1.msra.mxu0 0.0
    %826 = vmatprep.subr.mxu0 0.0
    %827 = vmatpush1.msra.mxu0 0.0
    %828 = vmatprep.subr.mxu0 0.0
    %829 = vmatpush1.msra.mxu0 0.0
    %830 = vmatprep.subr.mxu0 0.0
    %831 = vmatpush1.msra.mxu0 0.0
    %832 = vmatprep.subr.mxu0 0.0
    %833 = vmatpush1.msra.mxu0 0.0
    %834 = vmatprep.subr.mxu0 0.0
    %835 = vmatpush1.msra.mxu0 0.0
    %836 = vmatprep.subr.mxu0 0.0
    %837 = vmatpush1.msra.mxu0 0.0
    %838 = vmatprep.subr.mxu0 0.0
    %839 = vmatpush1.msra.mxu0 0.0
    %840 = vmatprep.subr.mxu0 0.0
    %841 = vmatpush1.msra.mxu0 0.0
    %842 = vmatprep.subr.mxu0 0.0
    %843 = vmatpush1.msra.mxu0 0.0
    %844 = vmatprep.subr.mxu0 0.0
    %845 = vmatpush1.msra.mxu0 0.0
    %846 = vmatprep.subr.mxu0 0.0
    %847 = vmatpush1.msra.mxu0 %v67
    %848 = vmatprep.subr.mxu0 0.0
    %849 = vmatpush2.msra.mxu0 0.0
    %850 = vmatprep.subr.mxu0 0.0
    %851 = vmatpush2.msra.mxu0 0.0
    %852 = vmatprep.subr.mxu0 0.0
    %853 = vmatpush2.msra.mxu0 0.0
    %854 = vmatprep.subr.mxu0 0.0
    %855 = vmatpush2.msra.mxu0 0.0
    %856 = vmatprep.subr.mxu0 0.0
    %857 = vmatpush2.msra.mxu0 0.0
    %858 = vmatprep.subr.mxu0 0.0
    %859 = vmatpush2.msra.mxu0 0.0
    %860 = vmatprep.subr.mxu0 0.0
    %861 = vmatpush2.msra.mxu0 0.0
    %862 = vmatprep.subr.mxu0 0.0
    %863 = vmatpush2.msra.mxu0 0.0
    %864 = vmatprep.subr.mxu0 0.0
    %865 = vmatpush2.msra.mxu0 0.0
    %866 = vmatprep.subr.mxu0 0.0
    %867 = vmatpush2.msra.mxu0 0.0
    %868 = vmatprep.subr.mxu0 0.0
    %869 = vmatpush2.msra.mxu0 0.0
    %870 = vmatprep.subr.mxu0 0.0
    %871 = vmatpush2.msra.mxu0 0.0
    %872 = vmatprep.subr.mxu0 0.0
    %873 = vmatpush2.msra.mxu0 0.0
    %874 = vmatprep.subr.mxu0 0.0
    %875 = vmatpush2.msra.mxu0 0.0
    %876 = vmatprep.subr.mxu0 0.0
    %877 = vmatpush2.msra.mxu0 0.0
    %878 = vmatprep.subr.mxu0 0.0
    %879 = vmatpush2.msra.mxu0 0.0
    %880 = vmatprep.mubr.f32.mxu0 0.0
    %881 = vmatmul.mubr.f32.gmra.mxu0 %v814
    %v882 = vpop.f32.mrf.mxu0
    %v883 = vadd.f32 %v55, %v882
    %v884 = vpop.f32.mrf.mxu0
    %885 = vdwg.mxu0
    %887 = vrot.lane.b32.xlu0 %v796, 64
    %v888 = vpop.permute.xlu0 %887
    %v889 = vsel %vm139, %v888, 0
    %891 = vmatprep.subr.mxu0 0.0
    %892 = vmatpush1.msra.mxu0 0.0
    %893 = vmatprep.subr.mxu0 0.0
    %894 = vmatpush1.msra.mxu0 0.0
    %895 = vmatprep.subr.mxu0 0.0
    %896 = vmatpush1.msra.mxu0 0.0
    %897 = vmatprep.subr.mxu0 0.0
    %898 = vmatpush1.msra.mxu0 0.0
    %899 = vmatprep.subr.mxu0 0.0
    %900 = vmatpush1.msra.mxu0 0.0
    %901 = vmatprep.subr.mxu0 0.0
    %902 = vmatpush1.msra.mxu0 0.0
    %903 = vmatprep.subr.mxu0 0.0
    %904 = vmatpush1.msra.mxu0 0.0
    %905 = vmatprep.subr.mxu0 0.0
    %906 = vmatpush1.msra.mxu0 0.0
    %907 = vmatprep.subr.mxu0 0.0
    %908 = vmatpush1.msra.mxu0 0.0
    %909 = vmatprep.subr.mxu0 0.0
    %910 = vmatpush1.msra.mxu0 0.0
    %911 = vmatprep.subr.mxu0 0.0
    %912 = vmatpush1.msra.mxu0 0.0
    %913 = vmatprep.subr.mxu0 0.0
    %914 = vmatpush1.msra.mxu0 0.0
    %915 = vmatprep.subr.mxu0 0.0
    %916 = vmatpush1.msra.mxu0 %v41
    %917 = vmatprep.subr.mxu0 0.0
    %918 = vmatpush1.msra.mxu0 %v40
    %919 = vmatprep.subr.mxu0 0.0
    %920 = vmatpush1.msra.mxu0 %v39
    %921 = vmatprep.subr.mxu0 0.0
    %922 = vmatpush1.msra.mxu0 %v38
    %923 = vmatprep.subr.mxu0 0.0
    %924 = vmatpush2.msra.mxu0 0.0
    %925 = vmatprep.subr.mxu0 0.0
    %926 = vmatpush2.msra.mxu0 0.0
    %927 = vmatprep.subr.mxu0 0.0
    %928 = vmatpush2.msra.mxu0 0.0
    %929 = vmatprep.subr.mxu0 0.0
    %930 = vmatpush2.msra.mxu0 0.0
    %931 = vmatprep.subr.mxu0 0.0
    %932 = vmatpush2.msra.mxu0 0.0
    %933 = vmatprep.subr.mxu0 0.0
    %934 = vmatpush2.msra.mxu0 0.0
    %935 = vmatprep.subr.mxu0 0.0
    %936 = vmatpush2.msra.mxu0 0.0
    %937 = vmatprep.subr.mxu0 0.0
    %938 = vmatpush2.msra.mxu0 0.0
    %939 = vmatprep.subr.mxu0 0.0
    %940 = vmatpush2.msra.mxu0 0.0
    %941 = vmatprep.subr.mxu0 0.0
    %942 = vmatpush2.msra.mxu0 0.0
    %943 = vmatprep.subr.mxu0 0.0
    %944 = vmatpush2.msra.mxu0 0.0
    %945 = vmatprep.subr.mxu0 0.0
    %946 = vmatpush2.msra.mxu0 0.0
    %947 = vmatprep.subr.mxu0 0.0
    %948 = vmatpush2.msra.mxu0 0.0
    %949 = vmatprep.subr.mxu0 0.0
    %950 = vmatpush2.msra.mxu0 0.0
    %951 = vmatprep.subr.mxu0 0.0
    %952 = vmatpush2.msra.mxu0 0.0
    %953 = vmatprep.subr.mxu0 0.0
    %954 = vmatpush2.msra.mxu0 0.0
    %955 = vmatprep.mubr.f32.mxu0 0.0
    %956 = vmatmul.mubr.f32.gmra.mxu0 %v889
    %v957 = vpop.f32.mrf.mxu0
    %v958 = vadd.f32 0.0, %v957
    %v959 = vpop.f32.mrf.mxu0
    %960 = vdwg.mxu0
    %v961 = vadd.f32 %v883, %v958
    %v962 = vtanh.pop %v961
    %v963 = vadd.f32 %v962, 1.0
    %v964 = vmul.f32 %v963, 0.5
    %v965 = vmul.f32 %v964, %v790
    %967 = vrot.lane.b32.xlu0 %v962, 32
    %v968 = vpop.permute.xlu0 %967
    %v970 = vmul.f32 %v964, %v968
    %972 = vrot.lane.b32.xlu0 %v970, 32
    %v973 = vpop.permute.xlu0 %972
    %v975 = vadd.f32 %v965, %v973
    %v976 = vtanh.pop %v975
    %978 = vrot.lane.b32.xlu0 %v976, 32
    %v979 = vpop.permute.xlu0 %978
    %v981 = vmul.f32 %v964, %v979
    %v982 = vmul.f32 %v981, %v240
    %984 = vrot.lane.b32.xlu0 %v982, 64
    %v985 = vpop.permute.xlu0 %984
    %v987 = vsel %vm247, %v985, 0.0
    %988 = vadd.xlane.f32.xlu0 %v987
    %v989 = vpop.xlane.xlu0 %988
    %v990 = vlaneseq
    %v991 = vshrl.u32 %v990, 7
    %v992 = vsub.s32 4, %v991
    %v993 = vrot.slane %v50, %v992
    %v994 = vmul.f32 %v989, %v993
    %v995 = vadd.f32 %v810, %v994
    %v996 = vrot.slane %v35, 5
    %v997 = vrot.slane %v36, 4
    %v998 = vsel %vm60, %v997, %v996
    %v999 = vsel %vm62, %v998, 0
    %1001 = vmatprep.subr.mxu0 0.0
    %1002 = vmatpush1.msra.mxu0 0.0
    %1003 = vmatprep.subr.mxu0 0.0
    %1004 = vmatpush1.msra.mxu0 0.0
    %1005 = vmatprep.subr.mxu0 0.0
    %1006 = vmatpush1.msra.mxu0 0.0
    %1007 = vmatprep.subr.mxu0 0.0
    %1008 = vmatpush1.msra.mxu0 0.0
    %1009 = vmatprep.subr.mxu0 0.0
    %1010 = vmatpush1.msra.mxu0 0.0
    %1011 = vmatprep.subr.mxu0 0.0
    %1012 = vmatpush1.msra.mxu0 0.0
    %1013 = vmatprep.subr.mxu0 0.0
    %1014 = vmatpush1.msra.mxu0 0.0
    %1015 = vmatprep.subr.mxu0 0.0
    %1016 = vmatpush1.msra.mxu0 0.0
    %1017 = vmatprep.subr.mxu0 0.0
    %1018 = vmatpush1.msra.mxu0 0.0
    %1019 = vmatprep.subr.mxu0 0.0
    %1020 = vmatpush1.msra.mxu0 0.0
    %1021 = vmatprep.subr.mxu0 0.0
    %1022 = vmatpush1.msra.mxu0 0.0
    %1023 = vmatprep.subr.mxu0 0.0
    %1024 = vmatpush1.msra.mxu0 0.0
    %1025 = vmatprep.subr.mxu0 0.0
    %1026 = vmatpush1.msra.mxu0 0.0
    %1027 = vmatprep.subr.mxu0 0.0
    %1028 = vmatpush1.msra.mxu0 0.0
    %1029 = vmatprep.subr.mxu0 0.0
    %1030 = vmatpush1.msra.mxu0 0.0
    %1031 = vmatprep.subr.mxu0 0.0
    %1032 = vmatpush1.msra.mxu0 %v67
    %1033 = vmatprep.subr.mxu0 0.0
    %1034 = vmatpush2.msra.mxu0 0.0
    %1035 = vmatprep.subr.mxu0 0.0
    %1036 = vmatpush2.msra.mxu0 0.0
    %1037 = vmatprep.subr.mxu0 0.0
    %1038 = vmatpush2.msra.mxu0 0.0
    %1039 = vmatprep.subr.mxu0 0.0
    %1040 = vmatpush2.msra.mxu0 0.0
    %1041 = vmatprep.subr.mxu0 0.0
    %1042 = vmatpush2.msra.mxu0 0.0
    %1043 = vmatprep.subr.mxu0 0.0
    %1044 = vmatpush2.msra.mxu0 0.0
    %1045 = vmatprep.subr.mxu0 0.0
    %1046 = vmatpush2.msra.mxu0 0.0
    %1047 = vmatprep.subr.mxu0 0.0
    %1048 = vmatpush2.msra.mxu0 0.0
    %1049 = vmatprep.subr.mxu0 0.0
    %1050 = vmatpush2.msra.mxu0 0.0
    %1051 = vmatprep.subr.mxu0 0.0
    %1052 = vmatpush2.msra.mxu0 0.0
    %1053 = vmatprep.subr.mxu0 0.0
    %1054 = vmatpush2.msra.mxu0 0.0
    %1055 = vmatprep.subr.mxu0 0.0
    %1056 = vmatpush2.msra.mxu0 0.0
    %1057 = vmatprep.subr.mxu0 0.0
    %1058 = vmatpush2.msra.mxu0 0.0
    %1059 = vmatprep.subr.mxu0 0.0
    %1060 = vmatpush2.msra.mxu0 0.0
    %1061 = vmatprep.subr.mxu0 0.0
    %1062 = vmatpush2.msra.mxu0 0.0
    %1063 = vmatprep.subr.mxu0 0.0
    %1064 = vmatpush2.msra.mxu0 0.0
    %1065 = vmatprep.mubr.f32.mxu0 0.0
    %1066 = vmatmul.mubr.f32.gmra.mxu0 %v999
    %v1067 = vpop.f32.mrf.mxu0
    %v1068 = vadd.f32 %v55, %v1067
    %v1069 = vpop.f32.mrf.mxu0
    %1070 = vdwg.mxu0
    %1072 = vrot.lane.b32.xlu0 %v981, 64
    %v1073 = vpop.permute.xlu0 %1072
    %v1074 = vsel %vm139, %v1073, 0
    %1076 = vmatprep.subr.mxu0 0.0
    %1077 = vmatpush1.msra.mxu0 0.0
    %1078 = vmatprep.subr.mxu0 0.0
    %1079 = vmatpush1.msra.mxu0 0.0
    %1080 = vmatprep.subr.mxu0 0.0
    %1081 = vmatpush1.msra.mxu0 0.0
    %1082 = vmatprep.subr.mxu0 0.0
    %1083 = vmatpush1.msra.mxu0 0.0
    %1084 = vmatprep.subr.mxu0 0.0
    %1085 = vmatpush1.msra.mxu0 0.0
    %1086 = vmatprep.subr.mxu0 0.0
    %1087 = vmatpush1.msra.mxu0 0.0
    %1088 = vmatprep.subr.mxu0 0.0
    %1089 = vmatpush1.msra.mxu0 0.0
    %1090 = vmatprep.subr.mxu0 0.0
    %1091 = vmatpush1.msra.mxu0 0.0
    %1092 = vmatprep.subr.mxu0 0.0
    %1093 = vmatpush1.msra.mxu0 0.0
    %1094 = vmatprep.subr.mxu0 0.0
    %1095 = vmatpush1.msra.mxu0 0.0
    %1096 = vmatprep.subr.mxu0 0.0
    %1097 = vmatpush1.msra.mxu0 0.0
    %1098 = vmatprep.subr.mxu0 0.0
    %1099 = vmatpush1.msra.mxu0 0.0
    %1100 = vmatprep.subr.mxu0 0.0
    %1101 = vmatpush1.msra.mxu0 %v41
    %1102 = vmatprep.subr.mxu0 0.0
    %1103 = vmatpush1.msra.mxu0 %v40
    %1104 = vmatprep.subr.mxu0 0.0
    %1105 = vmatpush1.msra.mxu0 %v39
    %1106 = vmatprep.subr.mxu0 0.0
    %1107 = vmatpush1.msra.mxu0 %v38
    %1108 = vmatprep.subr.mxu0 0.0
    %1109 = vmatpush2.msra.mxu0 0.0
    %1110 = vmatprep.subr.mxu0 0.0
    %1111 = vmatpush2.msra.mxu0 0.0
    %1112 = vmatprep.subr.mxu0 0.0
    %1113 = vmatpush2.msra.mxu0 0.0
    %1114 = vmatprep.subr.mxu0 0.0
    %1115 = vmatpush2.msra.mxu0 0.0
    %1116 = vmatprep.subr.mxu0 0.0
    %1117 = vmatpush2.msra.mxu0 0.0
    %1118 = vmatprep.subr.mxu0 0.0
    %1119 = vmatpush2.msra.mxu0 0.0
    %1120 = vmatprep.subr.mxu0 0.0
    %1121 = vmatpush2.msra.mxu0 0.0
    %1122 = vmatprep.subr.mxu0 0.0
    %1123 = vmatpush2.msra.mxu0 0.0
    %1124 = vmatprep.subr.mxu0 0.0
    %1125 = vmatpush2.msra.mxu0 0.0
    %1126 = vmatprep.subr.mxu0 0.0
    %1127 = vmatpush2.msra.mxu0 0.0
    %1128 = vmatprep.subr.mxu0 0.0
    %1129 = vmatpush2.msra.mxu0 0.0
    %1130 = vmatprep.subr.mxu0 0.0
    %1131 = vmatpush2.msra.mxu0 0.0
    %1132 = vmatprep.subr.mxu0 0.0
    %1133 = vmatpush2.msra.mxu0 0.0
    %1134 = vmatprep.subr.mxu0 0.0
    %1135 = vmatpush2.msra.mxu0 0.0
    %1136 = vmatprep.subr.mxu0 0.0
    %1137 = vmatpush2.msra.mxu0 0.0
    %1138 = vmatprep.subr.mxu0 0.0
    %1139 = vmatpush2.msra.mxu0 0.0
    %1140 = vmatprep.mubr.f32.mxu0 0.0
    %1141 = vmatmul.mubr.f32.gmra.mxu0 %v1074
    %v1142 = vpop.f32.mrf.mxu0
    %v1143 = vadd.f32 0.0, %v1142
    %v1144 = vpop.f32.mrf.mxu0
    %1145 = vdwg.mxu0
    %v1146 = vadd.f32 %v1068, %v1143
    %v1147 = vtanh.pop %v1146
    %v1148 = vadd.f32 %v1147, 1.0
    %v1149 = vmul.f32 %v1148, 0.5
    %v1150 = vmul.f32 %v1149, %v975
    %1152 = vrot.lane.b32.xlu0 %v1147, 32
    %v1153 = vpop.permute.xlu0 %1152
    %v1155 = vmul.f32 %v1149, %v1153
    %1157 = vrot.lane.b32.xlu0 %v1155, 32
    %v1158 = vpop.permute.xlu0 %1157
    %v1160 = vadd.f32 %v1150, %v1158
    %v1161 = vtanh.pop %v1160
    %1163 = vrot.lane.b32.xlu0 %v1161, 32
    %v1164 = vpop.permute.xlu0 %1163
    %v1166 = vmul.f32 %v1149, %v1164
    %v1167 = vmul.f32 %v1166, %v240
    %1169 = vrot.lane.b32.xlu0 %v1167, 64
    %v1170 = vpop.permute.xlu0 %1169
    %v1172 = vsel %vm247, %v1170, 0.0
    %1173 = vadd.xlane.f32.xlu0 %v1172
    %v1174 = vpop.xlane.xlu0 %1173
    %v1175 = vlaneseq
    %v1176 = vshrl.u32 %v1175, 7
    %v1177 = vsub.s32 5, %v1176
    %v1178 = vrot.slane %v50, %v1177
    %v1179 = vmul.f32 %v1174, %v1178
    %v1180 = vadd.f32 %v995, %v1179
    %v1181 = vrot.slane %v35, 6
    %v1182 = vrot.slane %v36, 5
    %v1183 = vsel %vm60, %v1182, %v1181
    %v1184 = vsel %vm62, %v1183, 0
    %1186 = vmatprep.subr.mxu0 0.0
    %1187 = vmatpush1.msra.mxu0 0.0
    %1188 = vmatprep.subr.mxu0 0.0
    %1189 = vmatpush1.msra.mxu0 0.0
    %1190 = vmatprep.subr.mxu0 0.0
    %1191 = vmatpush1.msra.mxu0 0.0
    %1192 = vmatprep.subr.mxu0 0.0
    %1193 = vmatpush1.msra.mxu0 0.0
    %1194 = vmatprep.subr.mxu0 0.0
    %1195 = vmatpush1.msra.mxu0 0.0
    %1196 = vmatprep.subr.mxu0 0.0
    %1197 = vmatpush1.msra.mxu0 0.0
    %1198 = vmatprep.subr.mxu0 0.0
    %1199 = vmatpush1.msra.mxu0 0.0
    %1200 = vmatprep.subr.mxu0 0.0
    %1201 = vmatpush1.msra.mxu0 0.0
    %1202 = vmatprep.subr.mxu0 0.0
    %1203 = vmatpush1.msra.mxu0 0.0
    %1204 = vmatprep.subr.mxu0 0.0
    %1205 = vmatpush1.msra.mxu0 0.0
    %1206 = vmatprep.subr.mxu0 0.0
    %1207 = vmatpush1.msra.mxu0 0.0
    %1208 = vmatprep.subr.mxu0 0.0
    %1209 = vmatpush1.msra.mxu0 0.0
    %1210 = vmatprep.subr.mxu0 0.0
    %1211 = vmatpush1.msra.mxu0 0.0
    %1212 = vmatprep.subr.mxu0 0.0
    %1213 = vmatpush1.msra.mxu0 0.0
    %1214 = vmatprep.subr.mxu0 0.0
    %1215 = vmatpush1.msra.mxu0 0.0
    %1216 = vmatprep.subr.mxu0 0.0
    %1217 = vmatpush1.msra.mxu0 %v67
    %1218 = vmatprep.subr.mxu0 0.0
    %1219 = vmatpush2.msra.mxu0 0.0
    %1220 = vmatprep.subr.mxu0 0.0
    %1221 = vmatpush2.msra.mxu0 0.0
    %1222 = vmatprep.subr.mxu0 0.0
    %1223 = vmatpush2.msra.mxu0 0.0
    %1224 = vmatprep.subr.mxu0 0.0
    %1225 = vmatpush2.msra.mxu0 0.0
    %1226 = vmatprep.subr.mxu0 0.0
    %1227 = vmatpush2.msra.mxu0 0.0
    %1228 = vmatprep.subr.mxu0 0.0
    %1229 = vmatpush2.msra.mxu0 0.0
    %1230 = vmatprep.subr.mxu0 0.0
    %1231 = vmatpush2.msra.mxu0 0.0
    %1232 = vmatprep.subr.mxu0 0.0
    %1233 = vmatpush2.msra.mxu0 0.0
    %1234 = vmatprep.subr.mxu0 0.0
    %1235 = vmatpush2.msra.mxu0 0.0
    %1236 = vmatprep.subr.mxu0 0.0
    %1237 = vmatpush2.msra.mxu0 0.0
    %1238 = vmatprep.subr.mxu0 0.0
    %1239 = vmatpush2.msra.mxu0 0.0
    %1240 = vmatprep.subr.mxu0 0.0
    %1241 = vmatpush2.msra.mxu0 0.0
    %1242 = vmatprep.subr.mxu0 0.0
    %1243 = vmatpush2.msra.mxu0 0.0
    %1244 = vmatprep.subr.mxu0 0.0
    %1245 = vmatpush2.msra.mxu0 0.0
    %1246 = vmatprep.subr.mxu0 0.0
    %1247 = vmatpush2.msra.mxu0 0.0
    %1248 = vmatprep.subr.mxu0 0.0
    %1249 = vmatpush2.msra.mxu0 0.0
    %1250 = vmatprep.mubr.f32.mxu0 0.0
    %1251 = vmatmul.mubr.f32.gmra.mxu0 %v1184
    %v1252 = vpop.f32.mrf.mxu0
    %v1253 = vadd.f32 %v55, %v1252
    %v1254 = vpop.f32.mrf.mxu0
    %1255 = vdwg.mxu0
    %1257 = vrot.lane.b32.xlu0 %v1166, 64
    %v1258 = vpop.permute.xlu0 %1257
    %v1259 = vsel %vm139, %v1258, 0
    %1261 = vmatprep.subr.mxu0 0.0
    %1262 = vmatpush1.msra.mxu0 0.0
    %1263 = vmatprep.subr.mxu0 0.0
    %1264 = vmatpush1.msra.mxu0 0.0
    %1265 = vmatprep.subr.mxu0 0.0
    %1266 = vmatpush1.msra.mxu0 0.0
    %1267 = vmatprep.subr.mxu0 0.0
    %1268 = vmatpush1.msra.mxu0 0.0
    %1269 = vmatprep.subr.mxu0 0.0
    %1270 = vmatpush1.msra.mxu0 0.0
    %1271 = vmatprep.subr.mxu0 0.0
    %1272 = vmatpush1.msra.mxu0 0.0
    %1273 = vmatprep.subr.mxu0 0.0
    %1274 = vmatpush1.msra.mxu0 0.0
    %1275 = vmatprep.subr.mxu0 0.0
    %1276 = vmatpush1.msra.mxu0 0.0
    %1277 = vmatprep.subr.mxu0 0.0
    %1278 = vmatpush1.msra.mxu0 0.0
    %1279 = vmatprep.subr.mxu0 0.0
    %1280 = vmatpush1.msra.mxu0 0.0
    %1281 = vmatprep.subr.mxu0 0.0
    %1282 = vmatpush1.msra.mxu0 0.0
    %1283 = vmatprep.subr.mxu0 0.0
    %1284 = vmatpush1.msra.mxu0 0.0
    %1285 = vmatprep.subr.mxu0 0.0
    %1286 = vmatpush1.msra.mxu0 %v41
    %1287 = vmatprep.subr.mxu0 0.0
    %1288 = vmatpush1.msra.mxu0 %v40
    %1289 = vmatprep.subr.mxu0 0.0
    %1290 = vmatpush1.msra.mxu0 %v39
    %1291 = vmatprep.subr.mxu0 0.0
    %1292 = vmatpush1.msra.mxu0 %v38
    %1293 = vmatprep.subr.mxu0 0.0
    %1294 = vmatpush2.msra.mxu0 0.0
    %1295 = vmatprep.subr.mxu0 0.0
    %1296 = vmatpush2.msra.mxu0 0.0
    %1297 = vmatprep.subr.mxu0 0.0
    %1298 = vmatpush2.msra.mxu0 0.0
    %1299 = vmatprep.subr.mxu0 0.0
    %1300 = vmatpush2.msra.mxu0 0.0
    %1301 = vmatprep.subr.mxu0 0.0
    %1302 = vmatpush2.msra.mxu0 0.0
    %1303 = vmatprep.subr.mxu0 0.0
    %1304 = vmatpush2.msra.mxu0 0.0
    %1305 = vmatprep.subr.mxu0 0.0
    %1306 = vmatpush2.msra.mxu0 0.0
    %1307 = vmatprep.subr.mxu0 0.0
    %1308 = vmatpush2.msra.mxu0 0.0
    %1309 = vmatprep.subr.mxu0 0.0
    %1310 = vmatpush2.msra.mxu0 0.0
    %1311 = vmatprep.subr.mxu0 0.0
    %1312 = vmatpush2.msra.mxu0 0.0
    %1313 = vmatprep.subr.mxu0 0.0
    %1314 = vmatpush2.msra.mxu0 0.0
    %1315 = vmatprep.subr.mxu0 0.0
    %1316 = vmatpush2.msra.mxu0 0.0
    %1317 = vmatprep.subr.mxu0 0.0
    %1318 = vmatpush2.msra.mxu0 0.0
    %1319 = vmatprep.subr.mxu0 0.0
    %1320 = vmatpush2.msra.mxu0 0.0
    %1321 = vmatprep.subr.mxu0 0.0
    %1322 = vmatpush2.msra.mxu0 0.0
    %1323 = vmatprep.subr.mxu0 0.0
    %1324 = vmatpush2.msra.mxu0 0.0
    %1325 = vmatprep.mubr.f32.mxu0 0.0
    %1326 = vmatmul.mubr.f32.gmra.mxu0 %v1259
    %v1327 = vpop.f32.mrf.mxu0
    %v1328 = vadd.f32 0.0, %v1327
    %v1329 = vpop.f32.mrf.mxu0
    %1330 = vdwg.mxu0
    %v1331 = vadd.f32 %v1253, %v1328
    %v1332 = vtanh.pop %v1331
    %v1333 = vadd.f32 %v1332, 1.0
    %v1334 = vmul.f32 %v1333, 0.5
    %v1335 = vmul.f32 %v1334, %v1160
    %1337 = vrot.lane.b32.xlu0 %v1332, 32
    %v1338 = vpop.permute.xlu0 %1337
    %v1340 = vmul.f32 %v1334, %v1338
    %1342 = vrot.lane.b32.xlu0 %v1340, 32
    %v1343 = vpop.permute.xlu0 %1342
    %v1345 = vadd.f32 %v1335, %v1343
    %v1346 = vtanh.pop %v1345
    %1348 = vrot.lane.b32.xlu0 %v1346, 32
    %v1349 = vpop.permute.xlu0 %1348
    %v1351 = vmul.f32 %v1334, %v1349
    %v1352 = vmul.f32 %v1351, %v240
    %1354 = vrot.lane.b32.xlu0 %v1352, 64
    %v1355 = vpop.permute.xlu0 %1354
    %v1357 = vsel %vm247, %v1355, 0.0
    %1358 = vadd.xlane.f32.xlu0 %v1357
    %v1359 = vpop.xlane.xlu0 %1358
    %v1360 = vlaneseq
    %v1361 = vshrl.u32 %v1360, 7
    %v1362 = vsub.s32 6, %v1361
    %v1363 = vrot.slane %v50, %v1362
    %v1364 = vmul.f32 %v1359, %v1363
    %v1365 = vadd.f32 %v1180, %v1364
    %v1366 = vrot.slane %v35, 7
    %v1367 = vrot.slane %v36, 6
    %v1368 = vsel %vm60, %v1367, %v1366
    %v1369 = vsel %vm62, %v1368, 0
    %1371 = vmatprep.subr.mxu0 0.0
    %1372 = vmatpush1.msra.mxu0 0.0
    %1373 = vmatprep.subr.mxu0 0.0
    %1374 = vmatpush1.msra.mxu0 0.0
    %1375 = vmatprep.subr.mxu0 0.0
    %1376 = vmatpush1.msra.mxu0 0.0
    %1377 = vmatprep.subr.mxu0 0.0
    %1378 = vmatpush1.msra.mxu0 0.0
    %1379 = vmatprep.subr.mxu0 0.0
    %1380 = vmatpush1.msra.mxu0 0.0
    %1381 = vmatprep.subr.mxu0 0.0
    %1382 = vmatpush1.msra.mxu0 0.0
    %1383 = vmatprep.subr.mxu0 0.0
    %1384 = vmatpush1.msra.mxu0 0.0
    %1385 = vmatprep.subr.mxu0 0.0
    %1386 = vmatpush1.msra.mxu0 0.0
    %1387 = vmatprep.subr.mxu0 0.0
    %1388 = vmatpush1.msra.mxu0 0.0
    %1389 = vmatprep.subr.mxu0 0.0
    %1390 = vmatpush1.msra.mxu0 0.0
    %1391 = vmatprep.subr.mxu0 0.0
    %1392 = vmatpush1.msra.mxu0 0.0
    %1393 = vmatprep.subr.mxu0 0.0
    %1394 = vmatpush1.msra.mxu0 0.0
    %1395 = vmatprep.subr.mxu0 0.0
    %1396 = vmatpush1.msra.mxu0 0.0
    %1397 = vmatprep.subr.mxu0 0.0
    %1398 = vmatpush1.msra.mxu0 0.0
    %1399 = vmatprep.subr.mxu0 0.0
    %1400 = vmatpush1.msra.mxu0 0.0
    %1401 = vmatprep.subr.mxu0 0.0
    %1402 = vmatpush1.msra.mxu0 %v67
    %1403 = vmatprep.subr.mxu0 0.0
    %1404 = vmatpush2.msra.mxu0 0.0
    %1405 = vmatprep.subr.mxu0 0.0
    %1406 = vmatpush2.msra.mxu0 0.0
    %1407 = vmatprep.subr.mxu0 0.0
    %1408 = vmatpush2.msra.mxu0 0.0
    %1409 = vmatprep.subr.mxu0 0.0
    %1410 = vmatpush2.msra.mxu0 0.0
    %1411 = vmatprep.subr.mxu0 0.0
    %1412 = vmatpush2.msra.mxu0 0.0
    %1413 = vmatprep.subr.mxu0 0.0
    %1414 = vmatpush2.msra.mxu0 0.0
    %1415 = vmatprep.subr.mxu0 0.0
    %1416 = vmatpush2.msra.mxu0 0.0
    %1417 = vmatprep.subr.mxu0 0.0
    %1418 = vmatpush2.msra.mxu0 0.0
    %1419 = vmatprep.subr.mxu0 0.0
    %1420 = vmatpush2.msra.mxu0 0.0
    %1421 = vmatprep.subr.mxu0 0.0
    %1422 = vmatpush2.msra.mxu0 0.0
    %1423 = vmatprep.subr.mxu0 0.0
    %1424 = vmatpush2.msra.mxu0 0.0
    %1425 = vmatprep.subr.mxu0 0.0
    %1426 = vmatpush2.msra.mxu0 0.0
    %1427 = vmatprep.subr.mxu0 0.0
    %1428 = vmatpush2.msra.mxu0 0.0
    %1429 = vmatprep.subr.mxu0 0.0
    %1430 = vmatpush2.msra.mxu0 0.0
    %1431 = vmatprep.subr.mxu0 0.0
    %1432 = vmatpush2.msra.mxu0 0.0
    %1433 = vmatprep.subr.mxu0 0.0
    %1434 = vmatpush2.msra.mxu0 0.0
    %1435 = vmatprep.mubr.f32.mxu0 0.0
    %1436 = vmatmul.mubr.f32.gmra.mxu0 %v1369
    %v1437 = vpop.f32.mrf.mxu0
    %v1438 = vadd.f32 %v55, %v1437
    %v1439 = vpop.f32.mrf.mxu0
    %1440 = vdwg.mxu0
    %1442 = vrot.lane.b32.xlu0 %v1351, 64
    %v1443 = vpop.permute.xlu0 %1442
    %v1444 = vsel %vm139, %v1443, 0
    %1446 = vmatprep.subr.mxu0 0.0
    %1447 = vmatpush1.msra.mxu0 0.0
    %1448 = vmatprep.subr.mxu0 0.0
    %1449 = vmatpush1.msra.mxu0 0.0
    %1450 = vmatprep.subr.mxu0 0.0
    %1451 = vmatpush1.msra.mxu0 0.0
    %1452 = vmatprep.subr.mxu0 0.0
    %1453 = vmatpush1.msra.mxu0 0.0
    %1454 = vmatprep.subr.mxu0 0.0
    %1455 = vmatpush1.msra.mxu0 0.0
    %1456 = vmatprep.subr.mxu0 0.0
    %1457 = vmatpush1.msra.mxu0 0.0
    %1458 = vmatprep.subr.mxu0 0.0
    %1459 = vmatpush1.msra.mxu0 0.0
    %1460 = vmatprep.subr.mxu0 0.0
    %1461 = vmatpush1.msra.mxu0 0.0
    %1462 = vmatprep.subr.mxu0 0.0
    %1463 = vmatpush1.msra.mxu0 0.0
    %1464 = vmatprep.subr.mxu0 0.0
    %1465 = vmatpush1.msra.mxu0 0.0
    %1466 = vmatprep.subr.mxu0 0.0
    %1467 = vmatpush1.msra.mxu0 0.0
    %1468 = vmatprep.subr.mxu0 0.0
    %1469 = vmatpush1.msra.mxu0 0.0
    %1470 = vmatprep.subr.mxu0 0.0
    %1471 = vmatpush1.msra.mxu0 %v41
    %1472 = vmatprep.subr.mxu0 0.0
    %1473 = vmatpush1.msra.mxu0 %v40
    %1474 = vmatprep.subr.mxu0 0.0
    %1475 = vmatpush1.msra.mxu0 %v39
    %1476 = vmatprep.subr.mxu0 0.0
    %1477 = vmatpush1.msra.mxu0 %v38
    %1478 = vmatprep.subr.mxu0 0.0
    %1479 = vmatpush2.msra.mxu0 0.0
    %1480 = vmatprep.subr.mxu0 0.0
    %1481 = vmatpush2.msra.mxu0 0.0
    %1482 = vmatprep.subr.mxu0 0.0
    %1483 = vmatpush2.msra.mxu0 0.0
    %1484 = vmatprep.subr.mxu0 0.0
    %1485 = vmatpush2.msra.mxu0 0.0
    %1486 = vmatprep.subr.mxu0 0.0
    %1487 = vmatpush2.msra.mxu0 0.0
    %1488 = vmatprep.subr.mxu0 0.0
    %1489 = vmatpush2.msra.mxu0 0.0
    %1490 = vmatprep.subr.mxu0 0.0
    %1491 = vmatpush2.msra.mxu0 0.0
    %1492 = vmatprep.subr.mxu0 0.0
    %1493 = vmatpush2.msra.mxu0 0.0
    %1494 = vmatprep.subr.mxu0 0.0
    %1495 = vmatpush2.msra.mxu0 0.0
    %1496 = vmatprep.subr.mxu0 0.0
    %1497 = vmatpush2.msra.mxu0 0.0
    %1498 = vmatprep.subr.mxu0 0.0
    %1499 = vmatpush2.msra.mxu0 0.0
    %1500 = vmatprep.subr.mxu0 0.0
    %1501 = vmatpush2.msra.mxu0 0.0
    %1502 = vmatprep.subr.mxu0 0.0
    %1503 = vmatpush2.msra.mxu0 0.0
    %1504 = vmatprep.subr.mxu0 0.0
    %1505 = vmatpush2.msra.mxu0 0.0
    %1506 = vmatprep.subr.mxu0 0.0
    %1507 = vmatpush2.msra.mxu0 0.0
    %1508 = vmatprep.subr.mxu0 0.0
    %1509 = vmatpush2.msra.mxu0 0.0
    %1510 = vmatprep.mubr.f32.mxu0 0.0
    %1511 = vmatmul.mubr.f32.gmra.mxu0 %v1444
    %v1512 = vpop.f32.mrf.mxu0
    %v1513 = vadd.f32 0.0, %v1512
    %v1514 = vpop.f32.mrf.mxu0
    %1515 = vdwg.mxu0
    %v1516 = vadd.f32 %v1438, %v1513
    %v1517 = vtanh.pop %v1516
    %v1518 = vadd.f32 %v1517, 1.0
    %v1519 = vmul.f32 %v1518, 0.5
    %v1520 = vmul.f32 %v1519, %v1345
    %1522 = vrot.lane.b32.xlu0 %v1517, 32
    %v1523 = vpop.permute.xlu0 %1522
    %v1525 = vmul.f32 %v1519, %v1523
    %1527 = vrot.lane.b32.xlu0 %v1525, 32
    %v1528 = vpop.permute.xlu0 %1527
    %v1530 = vadd.f32 %v1520, %v1528
    %v1531 = vtanh.pop %v1530
    %1533 = vrot.lane.b32.xlu0 %v1531, 32
    %v1534 = vpop.permute.xlu0 %1533
    %v1536 = vmul.f32 %v1519, %v1534
    %v1537 = vmul.f32 %v1536, %v240
    %1539 = vrot.lane.b32.xlu0 %v1537, 64
    %v1540 = vpop.permute.xlu0 %1539
    %v1542 = vsel %vm247, %v1540, 0.0
    %1543 = vadd.xlane.f32.xlu0 %v1542
    %v1544 = vpop.xlane.xlu0 %1543
    %v1545 = vlaneseq
    %v1546 = vshrl.u32 %v1545, 7
    %v1547 = vsub.s32 7, %v1546
    %v1548 = vrot.slane %v50, %v1547
    %v1549 = vmul.f32 %v1544, %v1548
    %v1550 = vadd.f32 %v1365, %v1549
    %vm1551 = vcmask 58368
    %v1552 = vsel %vm1551, %v1550, -inf
    %1553 = vmax.xlane.f32.xlu0 %v1552
    %v1554 = vpop.xlane.xlu0 %1553
    %v1555 = vsub.f32 %v1550, %v1554
    %v1556 = vmul.f32 %v1555, 1.442695
    %v1557 = vpow.pop %v1556
    %v1558 = vsel %vm1551, %v1557, 0.0
    %1559 = vadd.xlane.f32.xlu0 %v1558
    %v1560 = vpop.xlane.xlu0 %1559
    %v1561 = vrcp.pop %v1560
    %v1562 = vmul.f32 %v1557, %v1561
    %1563 = vst.msk [vmem:[#allocation5] sm:$0x3] %vm1551, %v1562
    // Predicated region
    $region26: #{tpu_custom_call.1} parent=1 // pred_check
      _
    $region27: #{tpu_custom_call.1} parent=1 // pred_check_branch
      %1565 = sbr.rel (0) target = $region29
    $region28: #{tpu_custom_call.1} parent=1 // pred_region
      %s1567 = ssub.s32 32, 32
      %1568 = vsyncadd [#allocation4], %s1567
      %s1570 = sshll.u32 [#allocation5], 4
      %s1571 = int_to_ptr.vmem [resolvable:$true] %s1570
      %1573 = dma.vmem_to_hbm [thread:$0]  %s1571, 32, %s5, [#allocation4]
    $region29: #{tpu_custom_call.1} parent=1 // pred_fallthru
      _
    // Predicated region
    $region30: #{tpu_custom_call.1} parent=1 // pred_check
      _
    $region31: #{tpu_custom_call.1} parent=1 // pred_check_branch
      %1575 = sbr.rel (0) target = $region33
    $region32: #{tpu_custom_call.1} parent=1 // pred_region
      %1576 = dma.done [#allocation4], 32
    $region33: #{tpu_custom_call.1} parent=1 // pred_fallthru
      _
    %1577 = vsyncpa [#allocation3], 1
    %1578 = vsyncpa [#allocation4], 1

</llo_original>
